<compile_context>
chip_gen: v7x
topology: tpu7x:2x2x1
jax: 0.10.0
libtpu: 0.0.40
codegen_flags: <defaults>
</compile_context>

<pallas_src>
import jax
import jax.numpy as jnp
import numpy as np
from jax.experimental import pallas as pl
from jax.experimental.pallas import tpu as pltpu


def _zero_conv2d_kernel(x_ref, w_ref, b_ref, o_ref, xpad_ref):
    """One batch element per grid step.

    x_ref    : (1, H, W, Cin)      unpadded NHWC input tile
    w_ref    : (9*Cin, Cout_pad)   im2col weights, exp(scale*3) folded in,
                                   Cout zero-padded to a multiple of 128
    b_ref    : (1, Cout_pad)       bias with exp(scale*3) folded in, zero-padded
    o_ref    : (1, H*W, Cout_pad)  flat, lane-dense output tile
    xpad_ref : (H+2, W+2, Cin)     VMEM scratch holding the constant-1 halo
    """
    H, W, Cin = x_ref.shape[1], x_ref.shape[2], x_ref.shape[3]

    # Constant-1 halo built in VMEM (no wrapper-side jnp.pad HBM round-trip).
    xpad_ref[...] = jnp.ones(xpad_ref.shape, xpad_ref.dtype)
    xpad_ref[1:H + 1, 1:W + 1, :] = x_ref[0].astype(xpad_ref.dtype)
    xpad = xpad_ref[...]                                    # (H+2, W+2, Cin)

    # im2col: concatenate the 9 shifted views along the channel/lane axis,
    # one reshape, then a single fused MXU matmul with K = 9*Cin.
    taps = []
    for ky in range(3):
        for kx in range(3):
            taps.append(xpad[ky:ky + H, kx:kx + W, :])      # (H, W, Cin)
    patches = jnp.concatenate(taps, axis=-1)                # (H, W, 9*Cin)
    patches = patches.reshape(H * W, 9 * Cin)               # (H*W, 9*Cin)

    acc = jnp.dot(patches, w_ref[...], preferred_element_type=jnp.float32)
    acc = acc + b_ref[...].astype(jnp.float32)              # (H*W, Cout_pad)

    # Flat, lane-dense store (no in-kernel reshape back to (H, W, Cout)).
    o_ref[...] = acc[None].astype(o_ref.dtype)


@jax.jit
def zero_conv2d(x_nchw, weight_oihw, bias, scale):
    """x_nchw: (N, Cin, H, W); weight_oihw: (Cout, Cin, 3, 3);
    bias: (Cout,); scale: (1, Cout, 1, 1).  Returns (N, Cout, H, W)."""
    N, Cin, H, W = x_nchw.shape
    Cout = weight_oihw.shape[0]
    Hp, Wp = H + 2, W + 2
    Cout_pad = ((Cout + 127) // 128) * 128                  # lane-dense columns

    # --- wrapper glue: layout conversion + parameter folding (tiny tensors) ---
    x_nhwc = jnp.transpose(x_nchw, (0, 2, 3, 1))            # (N, H, W, Cin)

    e = jnp.exp(scale.reshape(Cout).astype(jnp.float32) * 3.0)   # (Cout,)
    w_hwio = jnp.transpose(weight_oihw, (2, 3, 1, 0))       # (3, 3, Cin, Cout)
    # Row ordering of the (9*Cin, Cout) matrix is (ky, kx, ci) — it matches
    # the tap concatenation order inside the kernel.
    w2 = w_hwio.reshape(9 * Cin, Cout).astype(jnp.float32) * e[None, :]
    b2 = bias.astype(jnp.float32) * e
    # Zero-pad Cout so garbage lanes stay exactly zero; sliced off below.
    w2p = jnp.pad(w2, ((0, 0), (0, Cout_pad - Cout))).astype(x_nchw.dtype)
    b2p = jnp.pad(b2, (0, Cout_pad - Cout)).reshape(1, Cout_pad)

    out_flat = pl.pallas_call(
        _zero_conv2d_kernel,
        out_shape=jax.ShapeDtypeStruct((N, H * W, Cout_pad), x_nchw.dtype),
        grid_spec=pltpu.PrefetchScalarGridSpec(
            num_scalar_prefetch=0,
            grid=(N,),
            in_specs=[
                pl.BlockSpec((1, H, W, Cin), lambda n: (n, 0, 0, 0)),
                pl.BlockSpec((9 * Cin, Cout_pad), lambda n: (0, 0)),
                pl.BlockSpec((1, Cout_pad), lambda n: (0, 0)),
            ],
            out_specs=pl.BlockSpec((1, H * W, Cout_pad), lambda n: (n, 0, 0)),
            scratch_shapes=[pltpu.VMEM((Hp, Wp, Cin), jnp.float32)],
        ),
        compiler_params=pltpu.CompilerParams(
            dimension_semantics=("parallel",),
        ),
    )(x_nhwc, w2p, b2p)

    out = out_flat[:, :, :Cout].reshape(N, H, W, Cout)      # drop padded lanes
    return jnp.transpose(out, (0, 3, 1, 2))                 # (N, Cout, H, W)


def zero_conv2d_ref(x_nchw, weight_oihw, bias, scale):
    """Pure-JAX reference matching the PyTorch forward."""
    x_pad = jnp.pad(
        x_nchw, ((0, 0), (0, 0), (1, 1), (1, 1)), constant_values=1.0
    )
    out = jax.lax.conv_general_dilated(
        x_pad, weight_oihw, window_strides=(1, 1), padding="VALID",
        dimension_numbers=("NCHW", "OIHW", "NCHW"),
    )
    out = out + bias.reshape(1, -1, 1, 1)
    out = out * jnp.exp(scale * 3.0)
    return out


if __name__ == "__main__":
    N, Cin, H, W = 2, 4, 16, 16
    Cout = 8

    key = jax.random.PRNGKey(0)
    kx, kw, kb, ks = jax.random.split(key, 4)

    x = jax.random.normal(kx, (N, Cin, H, W), dtype=jnp.float32)
    # Module zero-inits these; use small deterministic random values instead
    # so the kernel's compute path is actually exercised.
    weight = 0.05 * jax.random.normal(kw, (Cout, Cin, 3, 3), dtype=jnp.float32)
    bias = 0.05 * jax.random.normal(kb, (Cout,), dtype=jnp.float32)
    scale = 0.1 * jax.random.normal(ks, (1, Cout, 1, 1), dtype=jnp.float32)

    out = zero_conv2d(x, weight, bias, scale)
    out = jax.block_until_ready(out)

    ref = jax.block_until_ready(zero_conv2d_ref(x, weight, bias, scale))
    np.testing.assert_allclose(np.asarray(out), np.asarray(ref),
                               rtol=1e-5, atol=1e-5)

    print("KERNEL_OK")
</pallas_src>

<mosaic_0001>
module attributes {stable_mosaic.version = 11 : i64} {
  func.func @_zero_conv2d_kernel(%arg0: i32, %arg1: memref<1x16x16x4xf32, #tpu.memory_space<vmem>>, %arg2: memref<36x128xf32, #tpu.memory_space<vmem>>, %arg3: memref<1x128xf32, #tpu.memory_space<vmem>>, %arg4: memref<1x256x128xf32, #tpu.memory_space<vmem>>, %arg5: memref<18x18x4xf32, #tpu.memory_space<vmem>>) attributes {dimension_semantics = [#tpu.dimension_semantics<parallel>], iteration_bounds = array<i64: 2>, scalar_prefetch = 0 : i64, scratch_operands = 1 : i64, tpu.core_type = #tpu.core_type<tc>, window_params = [{transform_indices = @transform_0, window_bounds = array<i64: 1, 16, 16, 4>}, {pipeline_mode = #tpu.pipeline_mode<synchronous>, transform_indices = @transform_1, window_bounds = array<i64: 36, 128>}, {pipeline_mode = #tpu.pipeline_mode<synchronous>, transform_indices = @transform_2, window_bounds = array<i64: 1, 128>}, {transform_indices = @transform_3, window_bounds = array<i64: 1, 256, 128>}]} {
    %cst = arith.constant 1.000000e+00 : f32
    %0 = vector.broadcast %cst : f32 to vector<18x18x4xf32>
    %c0 = arith.constant 0 : index
    %c0_0 = arith.constant 0 : index
    %c0_1 = arith.constant 0 : index
    %1 = vector.load %arg5[%c0, %c0_0, %c0_1] : memref<18x18x4xf32, #tpu.memory_space<vmem>>, vector<18x18x4xf32>
    tpu.vector_store %arg5[%c0, %c0_0, %c0_1], %0 {strides = array<i32>} : memref<18x18x4xf32, #tpu.memory_space<vmem>>, vector<18x18x4xf32>,
    %c0_2 = arith.constant 0 : index
    %c0_3 = arith.constant 0 : index
    %c0_4 = arith.constant 0 : index
    %c0_5 = arith.constant 0 : index
    %2 = vector.load %arg1[%c0_2, %c0_3, %c0_4, %c0_5] : memref<1x16x16x4xf32, #tpu.memory_space<vmem>>, vector<1x16x16x4xf32>
    %3 = vector.shape_cast %2 : vector<1x16x16x4xf32> to vector<16x16x4xf32>
    %c1 = arith.constant 1 : index
    %c1_6 = arith.constant 1 : index
    %c0_7 = arith.constant 0 : index
    %4 = vector.load %arg5[%c1, %c1_6, %c0_7] : memref<18x18x4xf32, #tpu.memory_space<vmem>>, vector<16x16x4xf32>
    tpu.vector_store %arg5[%c1, %c1_6, %c0_7], %3 {strides = array<i32>} : memref<18x18x4xf32, #tpu.memory_space<vmem>>, vector<16x16x4xf32>,
    %c0_8 = arith.constant 0 : index
    %c0_9 = arith.constant 0 : index
    %c0_10 = arith.constant 0 : index
    %5 = vector.load %arg5[%c0_8, %c0_9, %c0_10] : memref<18x18x4xf32, #tpu.memory_space<vmem>>, vector<18x18x4xf32>
    %6 = vector.extract_strided_slice %5 {offsets = [0, 0, 0], sizes = [16, 16, 4], strides = [1, 1, 1]} : vector<18x18x4xf32> to vector<16x16x4xf32>
    %7 = vector.extract_strided_slice %5 {offsets = [0, 1, 0], sizes = [16, 16, 4], strides = [1, 1, 1]} : vector<18x18x4xf32> to vector<16x16x4xf32>
    %8 = vector.extract_strided_slice %5 {offsets = [0, 2, 0], sizes = [16, 16, 4], strides = [1, 1, 1]} : vector<18x18x4xf32> to vector<16x16x4xf32>
    %9 = vector.extract_strided_slice %5 {offsets = [1, 0, 0], sizes = [16, 16, 4], strides = [1, 1, 1]} : vector<18x18x4xf32> to vector<16x16x4xf32>
    %10 = vector.extract_strided_slice %5 {offsets = [1, 1, 0], sizes = [16, 16, 4], strides = [1, 1, 1]} : vector<18x18x4xf32> to vector<16x16x4xf32>
    %11 = vector.extract_strided_slice %5 {offsets = [1, 2, 0], sizes = [16, 16, 4], strides = [1, 1, 1]} : vector<18x18x4xf32> to vector<16x16x4xf32>
    %12 = vector.extract_strided_slice %5 {offsets = [2, 0, 0], sizes = [16, 16, 4], strides = [1, 1, 1]} : vector<18x18x4xf32> to vector<16x16x4xf32>
    %13 = vector.extract_strided_slice %5 {offsets = [2, 1, 0], sizes = [16, 16, 4], strides = [1, 1, 1]} : vector<18x18x4xf32> to vector<16x16x4xf32>
    %14 = vector.extract_strided_slice %5 {offsets = [2, 2, 0], sizes = [16, 16, 4], strides = [1, 1, 1]} : vector<18x18x4xf32> to vector<16x16x4xf32>
    %15 = tpu.concatenate %6, %7, %8, %9, %10, %11, %12, %13, %14 in 2 : vector<16x16x4xf32>, vector<16x16x4xf32>, vector<16x16x4xf32>, vector<16x16x4xf32>, vector<16x16x4xf32>, vector<16x16x4xf32>, vector<16x16x4xf32>, vector<16x16x4xf32>, vector<16x16x4xf32> -> vector<16x16x36xf32>
    %16 = vector.shape_cast %15 : vector<16x16x36xf32> to vector<256x36xf32>
    %c0_11 = arith.constant 0 : index
    %c0_12 = arith.constant 0 : index
    %17 = vector.load %arg2[%c0_11, %c0_12] : memref<36x128xf32, #tpu.memory_space<vmem>>, vector<36x128xf32>
    %cst_13 = arith.constant dense<0.000000e+00> : vector<256x128xf32>
    %18 = tpu.matmul %16, %17, %cst_13 {dimension_numbers = #tpu.dot_dimension_numbers<[1], [0], [0], [1], [0, 0, 1, 1], [], []>} : vector<256x36xf32>, vector<36x128xf32>, vector<256x128xf32> -> vector<256x128xf32>
    %c0_14 = arith.constant 0 : index
    %c0_15 = arith.constant 0 : index
    %19 = vector.load %arg3[%c0_14, %c0_15] : memref<1x128xf32, #tpu.memory_space<vmem>>, vector<1x128xf32>
    %20 = vector.broadcast %19 : vector<1x128xf32> to vector<256x128xf32>
    %21 = arith.addf %18, %20 : vector<256x128xf32>
    %22 = vector.shape_cast %21 : vector<256x128xf32> to vector<1x256x128xf32>
    %c0_16 = arith.constant 0 : index
    %c0_17 = arith.constant 0 : index
    %c0_18 = arith.constant 0 : index
    %23 = vector.load %arg4[%c0_16, %c0_17, %c0_18] : memref<1x256x128xf32, #tpu.memory_space<vmem>>, vector<1x256x128xf32>
    tpu.vector_store %arg4[%c0_16, %c0_17, %c0_18], %22 {strides = array<i32>} : memref<1x256x128xf32, #tpu.memory_space<vmem>>, vector<1x256x128xf32>,
    return
  }
  func.func @transform_0(%arg0: i32) -> (i32, i32, i32, i32) {
    %c0_i32 = arith.constant 0 : i32
    %c0_i32_0 = arith.constant 0 : i32
    %c0_i32_1 = arith.constant 0 : i32
    %c0_i32_2 = arith.constant 0 : i32
    return %arg0, %c0_i32, %c0_i32_0, %c0_i32_1 : i32, i32, i32, i32
  }
  func.func @transform_1(%arg0: i32) -> (i32, i32) {
    %c0_i32 = arith.constant 0 : i32
    %c0_i32_0 = arith.constant 0 : i32
    %c0_i32_1 = arith.constant 0 : i32
    return %c0_i32, %c0_i32_0 : i32, i32
  }
  func.func @transform_2(%arg0: i32) -> (i32, i32) {
    %c0_i32 = arith.constant 0 : i32
    %c0_i32_0 = arith.constant 0 : i32
    %c0_i32_1 = arith.constant 0 : i32
    return %c0_i32, %c0_i32_0 : i32, i32
  }
  func.func @transform_3(%arg0: i32) -> (i32, i32, i32) {
    %c0_i32 = arith.constant 0 : i32
    %c0_i32_0 = arith.constant 0 : i32
    %c0_i32_1 = arith.constant 0 : i32
    return %arg0, %c0_i32, %c0_i32_0 : i32, i32, i32
  }
}

</mosaic_0001>

<llo_original>
// kernel: zero_conv2d.1
$region0: #{zero_conv2d.1}
  #allocation0 [shape = 'u32[]', space=smem, size = 0x4, offset = 0x4, fixed_abs, tag = 'smem constant byte address 0x4 - core index']
  #allocation1 [shape = 'u32[144,128]{1,0:T(1,128)}', space=vmem, size = 0x12000, scoped, tag = 'internal scratch']
  #allocation2 [shape = 'f32[18,18,4]{2,1,0:T(8,128)}', space=vmem, size = 0x36000, scoped, tag = 'scratch operand']
  %s0 = inlined_call_operand.vmem [shape: f32[2,16,16,4], index: 0, kind: input, shape index: {}]
  %s1 = inlined_call_operand.vmem [shape: f32[36,128], index: 1, kind: input, shape index: {}]
  %s2 = inlined_call_operand.vmem [shape: f32[1,128], index: 2, kind: input, shape index: {}]
  %s3 = inlined_call_operand.vmem [shape: f32[2,256,128], index: 3, kind: output, shape index: {}]
  %s4 = sld [smem:[#allocation0]]
  $region45: #{zero_conv2d.1} parent=0
    _
  %s6 = ssub.s32 1, %s4
  %s7 = scalar_select 0, %s6, %s4
  loop: start=0, step=1, limit=4
  $region2: #{zero_conv2d.1} parent=0 // loop_pre_header
    _
  $region3: #{zero_conv2d.1} parent=0 // loop_header
    %s9 = sphi 0, %s13
    %p10 = scmp.ge.s32.totalorder %s9, 4
    %s19 = sphi 0, %s21
    %s22 = sphi 0, %s19
    %s23 = sphi 0, %s22
    %s39 = sphi 0, %s23
    %s43 = sphi 0, %s43
    %s45 = sphi 0, %s43
    %s46 = sphi 0, %s45
    %s60 = sphi 0, %s46
    %s64 = sphi 0, %s64
    %s66 = sphi 0, %s64
    %s67 = sphi 0, %s66
    %s81 = sphi 0, %s67
    %s87 = sphi 0, %s89
    %s90 = sphi 0, %s87
    %s91 = sphi 0, %s90
    %s107 = sphi 0, %s91
  $region4: #{zero_conv2d.1} parent=0 // loop_header_branch
    %12 = sbr.rel (%p10) target = $region8
  $region5: #{zero_conv2d.1} parent=0 // loop_body
    %s14 = ssub.s32 %s9, 1
    %s15 = ssub.s32 %s9, 2
    %s16 = sadd.s32 %s9, 1
    %s17 = ssub.s32 %s9, %s16
    %p18 = scmp.eq.s32.totalorder %s17, 0
    %s20 = sadd.s32 %s19, 1
    %s21 = scalar_select %p18, %s19, %s20
    %p24 = pneg %p18
    %p25 = scmp.eq.s32.totalorder %s9, 1
    %p26 = por %p24, %p25
    %p27 = scmp.ne.s32.totalorder %s19, %s22
    %p28 = scmp.eq.s32.totalorder %s9, 0
    %p29 = por %p27, %p28
    %p30 = scmp.ne.s32.totalorder %s19, %s22
    %p31 = scmp.eq.s32.totalorder %s14, 1
    %p32 = por %p30, %p31
    %p33 = scmp.ne.s32.totalorder %s22, %s23
    %p34 = scmp.eq.s32.totalorder %s14, 0
    %p35 = por %p33, %p34
    %p36 = scmp.ne.s32.totalorder %s22, %s23
    %p37 = scmp.eq.s32.totalorder %s15, 1
    %p38 = por %p36, %p37
    %p40 = scmp.ne.s32.totalorder %s23, %s39
    %p41 = scmp.eq.s32.totalorder %s15, 0
    %p42 = por %p40, %p41
    %s44 = sadd.s32 %s43, 1
    %p47 = scmp.eq.s32.totalorder %s9, 1
    %p48 = scmp.ne.s32.totalorder %s43, %s45
    %p49 = scmp.eq.s32.totalorder %s9, 0
    %p50 = por %p48, %p49
    %p51 = scmp.ne.s32.totalorder %s43, %s45
    %p52 = scmp.eq.s32.totalorder %s14, 1
    %p53 = por %p51, %p52
    %p54 = scmp.ne.s32.totalorder %s45, %s46
    %p55 = scmp.eq.s32.totalorder %s14, 0
    %p56 = por %p54, %p55
    %p57 = scmp.ne.s32.totalorder %s45, %s46
    %p58 = scmp.eq.s32.totalorder %s15, 1
    %p59 = por %p57, %p58
    %p61 = scmp.ne.s32.totalorder %s46, %s60
    %p62 = scmp.eq.s32.totalorder %s15, 0
    %p63 = por %p61, %p62
    %s65 = sadd.s32 %s64, 1
    %p68 = scmp.eq.s32.totalorder %s9, 1
    %p69 = scmp.ne.s32.totalorder %s64, %s66
    %p70 = scmp.eq.s32.totalorder %s9, 0
    %p71 = por %p69, %p70
    %p72 = scmp.ne.s32.totalorder %s64, %s66
    %p73 = scmp.eq.s32.totalorder %s14, 1
    %p74 = por %p72, %p73
    %p75 = scmp.ne.s32.totalorder %s66, %s67
    %p76 = scmp.eq.s32.totalorder %s14, 0
    %p77 = por %p75, %p76
    %p78 = scmp.ne.s32.totalorder %s66, %s67
    %p79 = scmp.eq.s32.totalorder %s15, 1
    %p80 = por %p78, %p79
    %p82 = scmp.ne.s32.totalorder %s67, %s81
    %p83 = scmp.eq.s32.totalorder %s15, 0
    %p84 = por %p82, %p83
    %s85 = ssub.s32 %s9, %s16
    %p86 = scmp.eq.s32.totalorder %s85, 0
    %s88 = sadd.s32 %s87, 1
    %s89 = scalar_select %p86, %s87, %s88
    %p92 = pneg %p86
    %p93 = scmp.eq.s32.totalorder %s9, 1
    %p94 = por %p92, %p93
    %p95 = scmp.ne.s32.totalorder %s87, %s90
    %p96 = scmp.eq.s32.totalorder %s9, 0
    %p97 = por %p95, %p96
    %p98 = scmp.ne.s32.totalorder %s87, %s90
    %p99 = scmp.eq.s32.totalorder %s14, 1
    %p100 = por %p98, %p99
    %p101 = scmp.ne.s32.totalorder %s90, %s91
    %p102 = scmp.eq.s32.totalorder %s14, 0
    %p103 = por %p101, %p102
    %p104 = scmp.ne.s32.totalorder %s90, %s91
    %p105 = scmp.eq.s32.totalorder %s15, 1
    %p106 = por %p104, %p105
    %p108 = scmp.ne.s32.totalorder %s91, %s107
    %p109 = scmp.eq.s32.totalorder %s15, 0
    %p110 = por %p108, %p109
    %p111 = scmp.le.s32.totalorder 1, %s9
    %p112 = scmp.lt.s32.totalorder %s9, 3
    %p113 = pnand %p111, %p112
    %p114 = pneg %p113
    // Predicated region
    $region9: #{zero_conv2d.1} parent=5 // pred_check
      _
    $region10: #{zero_conv2d.1} parent=5 // pred_check_branch
      %116 = sbr.rel (%p113) target = $region12
    $region11: #{zero_conv2d.1} parent=5 // pred_region
      %s117 = ssub.s32 %s9, 1
      // Predicated region
      $region13: #{zero_conv2d.1} parent=11 // pred_check
        %p118 = pneg %p56
      $region14: #{zero_conv2d.1} parent=11 // pred_check_branch
        %120 = sbr.rel (%p118) target = $region16
      $region15: #{zero_conv2d.1} parent=11 // pred_region
        _
      $region16: #{zero_conv2d.1} parent=11 // pred_fallthru
        _
      // Predicated region
      $region17: #{zero_conv2d.1} parent=11 // pred_check
        %p121 = pneg %p77
      $region18: #{zero_conv2d.1} parent=11 // pred_check_branch
        %123 = sbr.rel (%p121) target = $region20
      $region19: #{zero_conv2d.1} parent=11 // pred_region
        _
      $region20: #{zero_conv2d.1} parent=11 // pred_fallthru
        _
    $region12: #{zero_conv2d.1} parent=5 // pred_fallthru
      _
    %p124 = scmp.lt.s32.totalorder %s9, 2
    // Predicated region
    $region21: #{zero_conv2d.1} parent=5 // pred_check
      %p125 = pneg %p124
    $region22: #{zero_conv2d.1} parent=5 // pred_check_branch
      %127 = sbr.rel (%p125) target = $region24
    $region23: #{zero_conv2d.1} parent=5 // pred_region
      // Predicated region
      $region25: #{zero_conv2d.1} parent=23 // pred_check
        %p128 = pneg %p29
      $region26: #{zero_conv2d.1} parent=23 // pred_check_branch
        %130 = sbr.rel (%p128) target = $region28
      $region27: #{zero_conv2d.1} parent=23 // pred_region
        %p131 = scmp.lt.s32.totalorder %s9, 1
        %s132 = scalar_select %p131, %s9, 1
        %s133 = smul.addr %s132, 32
        %s134 = smul.addr %s133, 8
        %s135 = scalar_lea.vmem %s0, %s134
      $region28: #{zero_conv2d.1} parent=23 // pred_fallthru
        _
    $region24: #{zero_conv2d.1} parent=5 // pred_fallthru
      _
    %p136 = scmp.le.s32.totalorder 1, %s9
    %p137 = scmp.lt.s32.totalorder %s9, 3
    %p138 = pnand %p136, %p137
    %p139 = pneg %p138
    // Predicated region
    $region29: #{zero_conv2d.1} parent=5 // pred_check
      _
    $region30: #{zero_conv2d.1} parent=5 // pred_check_branch
      %141 = sbr.rel (%p138) target = $region32
    $region31: #{zero_conv2d.1} parent=5 // pred_region
      %s142 = ssub.s32 %s9, 1
      %p143 = scmp.lt.s32.totalorder %s14, 1
      %s144 = scalar_select %p143, %s14, 1
      %s145 = smul.addr %s144, 32
      %s146 = smul.addr %s145, 8
      %s147 = scalar_lea.vmem %s0, %s146
      %p148 = pneg %p35
      %p149 = pneg %p32
      %p150 = pneg %p56
      %p151 = pneg %p53
      %p152 = pneg %p77
      %p153 = pneg %p74
      %p154 = pneg %p103
      %p155 = pneg %p100
      %p156 = scmp.lt.s32.totalorder %s14, 1
      %s157 = scalar_select %p156, %s14, 1
      %s158 = smul.addr %s157, 32
      %s159 = smul.addr %s158, 8
      %s160 = scalar_lea.vmem %s3, %s159
      %p161 = scmp.lt.s32.totalorder %s14, 1
      %s162 = scalar_select %p161, %s14, 1
      %s163 = smul.addr %s162, 32
      %s164 = smul.addr %s163, 8
      %s165 = scalar_lea.vmem %s0, %s164
      %p166 = scmp.lt.s32.totalorder %s14, 1
      %s167 = scalar_select %p166, %s14, 1
      %s168 = smul.addr %s167, 32
      %s169 = smul.addr %s168, 8
      %s170 = scalar_lea.vmem %s3, %s169
      %vm171 = vcmask 31744
      %172 = vst.msk [vmem:[#allocation2] sm:$0xff] %vm171, 1.0
      %173 = vst.msk [vmem:[#allocation2 + $0x8] sm:$0xff] %vm171, 1.0
      %vm174 = vcmask 25600
      %175 = vst.msk [vmem:[#allocation2 + $0x10] sm:$0x3] %vm174, 1.0
      %176 = vst.msk [vmem:[#allocation2 + $0x18] sm:$0xff] %vm171, 1.0
      %177 = vst.msk [vmem:[#allocation2 + $0x20] sm:$0xff] %vm171, 1.0
      %178 = vst.msk [vmem:[#allocation2 + $0x28] sm:$0x3] %vm174, 1.0
      %179 = vst.msk [vmem:[#allocation2 + $0x30] sm:$0xff] %vm171, 1.0
      %180 = vst.msk [vmem:[#allocation2 + $0x38] sm:$0xff] %vm171, 1.0
      %181 = vst.msk [vmem:[#allocation2 + $0x40] sm:$0x3] %vm174, 1.0
      %182 = vst.msk [vmem:[#allocation2 + $0x48] sm:$0xff] %vm171, 1.0
      %183 = vst.msk [vmem:[#allocation2 + $0x50] sm:$0xff] %vm171, 1.0
      %184 = vst.msk [vmem:[#allocation2 + $0x58] sm:$0x3] %vm174, 1.0
      %185 = vst.msk [vmem:[#allocation2 + $0x60] sm:$0xff] %vm171, 1.0
      %186 = vst.msk [vmem:[#allocation2 + $0x68] sm:$0xff] %vm171, 1.0
      %187 = vst.msk [vmem:[#allocation2 + $0x70] sm:$0x3] %vm174, 1.0
      %188 = vst.msk [vmem:[#allocation2 + $0x78] sm:$0xff] %vm171, 1.0
      %189 = vst.msk [vmem:[#allocation2 + $0x80] sm:$0xff] %vm171, 1.0
      %190 = vst.msk [vmem:[#allocation2 + $0x88] sm:$0x3] %vm174, 1.0
      %191 = vst.msk [vmem:[#allocation2 + $0x90] sm:$0xff] %vm171, 1.0
      %192 = vst.msk [vmem:[#allocation2 + $0x98] sm:$0xff] %vm171, 1.0
      %193 = vst.msk [vmem:[#allocation2 + $0xa0] sm:$0x3] %vm174, 1.0
      %194 = vst.msk [vmem:[#allocation2 + $0xa8] sm:$0xff] %vm171, 1.0
      %195 = vst.msk [vmem:[#allocation2 + $0xb0] sm:$0xff] %vm171, 1.0
      %196 = vst.msk [vmem:[#allocation2 + $0xb8] sm:$0x3] %vm174, 1.0
      %197 = vst.msk [vmem:[#allocation2 + $0xc0] sm:$0xff] %vm171, 1.0
      %198 = vst.msk [vmem:[#allocation2 + $0xc8] sm:$0xff] %vm171, 1.0
      %199 = vst.msk [vmem:[#allocation2 + $0xd0] sm:$0x3] %vm174, 1.0
      %200 = vst.msk [vmem:[#allocation2 + $0xd8] sm:$0xff] %vm171, 1.0
      %201 = vst.msk [vmem:[#allocation2 + $0xe0] sm:$0xff] %vm171, 1.0
      %202 = vst.msk [vmem:[#allocation2 + $0xe8] sm:$0x3] %vm174, 1.0
      %203 = vst.msk [vmem:[#allocation2 + $0xf0] sm:$0xff] %vm171, 1.0
      %204 = vst.msk [vmem:[#allocation2 + $0xf8] sm:$0xff] %vm171, 1.0
      %205 = vst.msk [vmem:[#allocation2 + $0x100] sm:$0x3] %vm174, 1.0
      %206 = vst.msk [vmem:[#allocation2 + $0x108] sm:$0xff] %vm171, 1.0
      %207 = vst.msk [vmem:[#allocation2 + $0x110] sm:$0xff] %vm171, 1.0
      %208 = vst.msk [vmem:[#allocation2 + $0x118] sm:$0x3] %vm174, 1.0
      %209 = vst.msk [vmem:[#allocation2 + $0x120] sm:$0xff] %vm171, 1.0
      %210 = vst.msk [vmem:[#allocation2 + $0x128] sm:$0xff] %vm171, 1.0
      %211 = vst.msk [vmem:[#allocation2 + $0x130] sm:$0x3] %vm174, 1.0
      %212 = vst.msk [vmem:[#allocation2 + $0x138] sm:$0xff] %vm171, 1.0
      %213 = vst.msk [vmem:[#allocation2 + $0x140] sm:$0xff] %vm171, 1.0
      %214 = vst.msk [vmem:[#allocation2 + $0x148] sm:$0x3] %vm174, 1.0
      %215 = vst.msk [vmem:[#allocation2 + $0x150] sm:$0xff] %vm171, 1.0
      %216 = vst.msk [vmem:[#allocation2 + $0x158] sm:$0xff] %vm171, 1.0
      %217 = vst.msk [vmem:[#allocation2 + $0x160] sm:$0x3] %vm174, 1.0
      %218 = vst.msk [vmem:[#allocation2 + $0x168] sm:$0xff] %vm171, 1.0
      %219 = vst.msk [vmem:[#allocation2 + $0x170] sm:$0xff] %vm171, 1.0
      %220 = vst.msk [vmem:[#allocation2 + $0x178] sm:$0x3] %vm174, 1.0
      %221 = vst.msk [vmem:[#allocation2 + $0x180] sm:$0xff] %vm171, 1.0
      %222 = vst.msk [vmem:[#allocation2 + $0x188] sm:$0xff] %vm171, 1.0
      %223 = vst.msk [vmem:[#allocation2 + $0x190] sm:$0x3] %vm174, 1.0
      %224 = vst.msk [vmem:[#allocation2 + $0x198] sm:$0xff] %vm171, 1.0
      %225 = vst.msk [vmem:[#allocation2 + $0x1a0] sm:$0xff] %vm171, 1.0
      %226 = vst.msk [vmem:[#allocation2 + $0x1a8] sm:$0x3] %vm174, 1.0
      %v227 = vld [vmem:[%s165] sm:$0xff]
      %v228 = vld [vmem:[%s165 + $0x8] sm:$0xff]
      %v229 = vld [vmem:[%s165 + $0x10] sm:$0xff]
      %v230 = vld [vmem:[%s165 + $0x18] sm:$0xff]
      %v231 = vld [vmem:[%s165 + $0x20] sm:$0xff]
      %v232 = vld [vmem:[%s165 + $0x28] sm:$0xff]
      %v233 = vld [vmem:[%s165 + $0x30] sm:$0xff]
      %v234 = vld [vmem:[%s165 + $0x38] sm:$0xff]
      %v235 = vld [vmem:[%s165 + $0x40] sm:$0xff]
      %v236 = vld [vmem:[%s165 + $0x48] sm:$0xff]
      %v237 = vld [vmem:[%s165 + $0x50] sm:$0xff]
      %v238 = vld [vmem:[%s165 + $0x58] sm:$0xff]
      %v239 = vld [vmem:[%s165 + $0x60] sm:$0xff]
      %v240 = vld [vmem:[%s165 + $0x68] sm:$0xff]
      %v241 = vld [vmem:[%s165 + $0x70] sm:$0xff]
      %v242 = vld [vmem:[%s165 + $0x78] sm:$0xff]
      %v243 = vld [vmem:[%s165 + $0x80] sm:$0xff]
      %v244 = vld [vmem:[%s165 + $0x88] sm:$0xff]
      %v245 = vld [vmem:[%s165 + $0x90] sm:$0xff]
      %v246 = vld [vmem:[%s165 + $0x98] sm:$0xff]
      %v247 = vld [vmem:[%s165 + $0xa0] sm:$0xff]
      %v248 = vld [vmem:[%s165 + $0xa8] sm:$0xff]
      %v249 = vld [vmem:[%s165 + $0xb0] sm:$0xff]
      %v250 = vld [vmem:[%s165 + $0xb8] sm:$0xff]
      %v251 = vld [vmem:[%s165 + $0xc0] sm:$0xff]
      %v252 = vld [vmem:[%s165 + $0xc8] sm:$0xff]
      %v253 = vld [vmem:[%s165 + $0xd0] sm:$0xff]
      %v254 = vld [vmem:[%s165 + $0xd8] sm:$0xff]
      %v255 = vld [vmem:[%s165 + $0xe0] sm:$0xff]
      %v256 = vld [vmem:[%s165 + $0xe8] sm:$0xff]
      %v257 = vld [vmem:[%s165 + $0xf0] sm:$0xff]
      %v258 = vld [vmem:[%s165 + $0xf8] sm:$0xff]
      %s259 = scalar_lea.vmem [#allocation2], 24
      %260 = vst.msk [vmem:[%s259 + $0x1] sm:$0xff] %vm171, %v227
      %261 = vst.msk [vmem:[%s259 + $0x9] sm:$0xff] %vm171, %v228
      %262 = vst.msk [vmem:[%s259 + $0x19] sm:$0xff] %vm171, %v229
      %263 = vst.msk [vmem:[%s259 + $0x21] sm:$0xff] %vm171, %v230
      %264 = vst.msk [vmem:[%s259 + $0x31] sm:$0xff] %vm171, %v231
      %265 = vst.msk [vmem:[%s259 + $0x39] sm:$0xff] %vm171, %v232
      %266 = vst.msk [vmem:[%s259 + $0x49] sm:$0xff] %vm171, %v233
      %267 = vst.msk [vmem:[%s259 + $0x51] sm:$0xff] %vm171, %v234
      %268 = vst.msk [vmem:[%s259 + $0x61] sm:$0xff] %vm171, %v235
      %269 = vst.msk [vmem:[%s259 + $0x69] sm:$0xff] %vm171, %v236
      %270 = vst.msk [vmem:[%s259 + $0x79] sm:$0xff] %vm171, %v237
      %271 = vst.msk [vmem:[%s259 + $0x81] sm:$0xff] %vm171, %v238
      %272 = vst.msk [vmem:[%s259 + $0x91] sm:$0xff] %vm171, %v239
      %273 = vst.msk [vmem:[%s259 + $0x99] sm:$0xff] %vm171, %v240
      %274 = vst.msk [vmem:[%s259 + $0xa9] sm:$0xff] %vm171, %v241
      %275 = vst.msk [vmem:[%s259 + $0xb1] sm:$0xff] %vm171, %v242
      %276 = vst.msk [vmem:[%s259 + $0xc1] sm:$0xff] %vm171, %v243
      %277 = vst.msk [vmem:[%s259 + $0xc9] sm:$0xff] %vm171, %v244
      %278 = vst.msk [vmem:[%s259 + $0xd9] sm:$0xff] %vm171, %v245
      %279 = vst.msk [vmem:[%s259 + $0xe1] sm:$0xff] %vm171, %v246
      %280 = vst.msk [vmem:[%s259 + $0xf1] sm:$0xff] %vm171, %v247
      %281 = vst.msk [vmem:[%s259 + $0xf9] sm:$0xff] %vm171, %v248
      %282 = vst.msk [vmem:[%s259 + $0x109] sm:$0xff] %vm171, %v249
      %283 = vst.msk [vmem:[%s259 + $0x111] sm:$0xff] %vm171, %v250
      %284 = vst.msk [vmem:[%s259 + $0x121] sm:$0xff] %vm171, %v251
      %285 = vst.msk [vmem:[%s259 + $0x129] sm:$0xff] %vm171, %v252
      %286 = vst.msk [vmem:[%s259 + $0x139] sm:$0xff] %vm171, %v253
      %287 = vst.msk [vmem:[%s259 + $0x141] sm:$0xff] %vm171, %v254
      %288 = vst.msk [vmem:[%s259 + $0x151] sm:$0xff] %vm171, %v255
      %289 = vst.msk [vmem:[%s259 + $0x159] sm:$0xff] %vm171, %v256
      %290 = vst.msk [vmem:[%s259 + $0x169] sm:$0xff] %vm171, %v257
      %291 = vst.msk [vmem:[%s259 + $0x171] sm:$0xff] %vm171, %v258
      %v292 = vld [vmem:[#allocation2] sm:$0xff]
      %v293 = vld [vmem:[#allocation2 + $0x8] sm:$0xff]
      %v294 = vld [vmem:[#allocation2 + $0x10] sm:$0x3]
      %v295 = vld [vmem:[#allocation2 + $0x18] sm:$0xff]
      %v296 = vld [vmem:[#allocation2 + $0x20] sm:$0xff]
      %v297 = vld [vmem:[#allocation2 + $0x28] sm:$0x3]
      %v298 = vld [vmem:[#allocation2 + $0x30] sm:$0xff]
      %v299 = vld [vmem:[#allocation2 + $0x38] sm:$0xff]
      %v300 = vld [vmem:[#allocation2 + $0x40] sm:$0x3]
      %v301 = vld [vmem:[#allocation2 + $0x48] sm:$0xff]
      %v302 = vld [vmem:[#allocation2 + $0x50] sm:$0xff]
      %v303 = vld [vmem:[#allocation2 + $0x58] sm:$0x3]
      %v304 = vld [vmem:[#allocation2 + $0x60] sm:$0xff]
      %v305 = vld [vmem:[#allocation2 + $0x68] sm:$0xff]
      %v306 = vld [vmem:[#allocation2 + $0x70] sm:$0x3]
      %v307 = vld [vmem:[#allocation2 + $0x78] sm:$0xff]
      %v308 = vld [vmem:[#allocation2 + $0x80] sm:$0xff]
      %v309 = vld [vmem:[#allocation2 + $0x88] sm:$0x3]
      %v310 = vld [vmem:[#allocation2 + $0x90] sm:$0xff]
      %v311 = vld [vmem:[#allocation2 + $0x98] sm:$0xff]
      %v312 = vld [vmem:[#allocation2 + $0xa0] sm:$0x3]
      %v313 = vld [vmem:[#allocation2 + $0xa8] sm:$0xff]
      %v314 = vld [vmem:[#allocation2 + $0xb0] sm:$0xff]
      %v315 = vld [vmem:[#allocation2 + $0xb8] sm:$0x3]
      %v316 = vld [vmem:[#allocation2 + $0xc0] sm:$0xff]
      %v317 = vld [vmem:[#allocation2 + $0xc8] sm:$0xff]
      %v318 = vld [vmem:[#allocation2 + $0xd0] sm:$0x3]
      %v319 = vld [vmem:[#allocation2 + $0xd8] sm:$0xff]
      %v320 = vld [vmem:[#allocation2 + $0xe0] sm:$0xff]
      %v321 = vld [vmem:[#allocation2 + $0xe8] sm:$0x3]
      %v322 = vld [vmem:[#allocation2 + $0xf0] sm:$0xff]
      %v323 = vld [vmem:[#allocation2 + $0xf8] sm:$0xff]
      %v324 = vld [vmem:[#allocation2 + $0x100] sm:$0x3]
      %v325 = vld [vmem:[#allocation2 + $0x108] sm:$0xff]
      %v326 = vld [vmem:[#allocation2 + $0x110] sm:$0xff]
      %v327 = vld [vmem:[#allocation2 + $0x118] sm:$0x3]
      %v328 = vld [vmem:[#allocation2 + $0x120] sm:$0xff]
      %v329 = vld [vmem:[#allocation2 + $0x128] sm:$0xff]
      %v330 = vld [vmem:[#allocation2 + $0x130] sm:$0x3]
      %v331 = vld [vmem:[#allocation2 + $0x138] sm:$0xff]
      %v332 = vld [vmem:[#allocation2 + $0x140] sm:$0xff]
      %v333 = vld [vmem:[#allocation2 + $0x148] sm:$0x3]
      %v334 = vld [vmem:[#allocation2 + $0x150] sm:$0xff]
      %v335 = vld [vmem:[#allocation2 + $0x158] sm:$0xff]
      %v336 = vld [vmem:[#allocation2 + $0x160] sm:$0x3]
      %v337 = vld [vmem:[#allocation2 + $0x168] sm:$0xff]
      %v338 = vld [vmem:[#allocation2 + $0x170] sm:$0xff]
      %v339 = vld [vmem:[#allocation2 + $0x178] sm:$0x3]
      %v340 = vld [vmem:[#allocation2 + $0x180] sm:$0xff]
      %v341 = vld [vmem:[#allocation2 + $0x188] sm:$0xff]
      %v342 = vld [vmem:[#allocation2 + $0x190] sm:$0x3]
      %v343 = vld [vmem:[#allocation2 + $0x198] sm:$0xff]
      %v344 = vld [vmem:[#allocation2 + $0x1a0] sm:$0xff]
      %v345 = vld [vmem:[#allocation2 + $0x1a8] sm:$0x3]
      %vm394 = vcmask 1046528
      %v395 = vrot.slane %v292, 1
      %v396 = vrot.slane %v293, 1
      %v397 = vsel %vm394, %v395, %v396
      %v398 = vrot.slane %v294, 1
      %v399 = vsel %vm394, %v396, %v398
      %v400 = vrot.slane %v295, 1
      %v401 = vrot.slane %v296, 1
      %v402 = vsel %vm394, %v400, %v401
      %v403 = vrot.slane %v297, 1
      %v404 = vsel %vm394, %v401, %v403
      %v405 = vrot.slane %v298, 1
      %v406 = vrot.slane %v299, 1
      %v407 = vsel %vm394, %v405, %v406
      %v408 = vrot.slane %v300, 1
      %v409 = vsel %vm394, %v406, %v408
      %v410 = vrot.slane %v301, 1
      %v411 = vrot.slane %v302, 1
      %v412 = vsel %vm394, %v410, %v411
      %v413 = vrot.slane %v303, 1
      %v414 = vsel %vm394, %v411, %v413
      %v415 = vrot.slane %v304, 1
      %v416 = vrot.slane %v305, 1
      %v417 = vsel %vm394, %v415, %v416
      %v418 = vrot.slane %v306, 1
      %v419 = vsel %vm394, %v416, %v418
      %v420 = vrot.slane %v307, 1
      %v421 = vrot.slane %v308, 1
      %v422 = vsel %vm394, %v420, %v421
      %v423 = vrot.slane %v309, 1
      %v424 = vsel %vm394, %v421, %v423
      %v425 = vrot.slane %v310, 1
      %v426 = vrot.slane %v311, 1
      %v427 = vsel %vm394, %v425, %v426
      %v428 = vrot.slane %v312, 1
      %v429 = vsel %vm394, %v426, %v428
      %v430 = vrot.slane %v313, 1
      %v431 = vrot.slane %v314, 1
      %v432 = vsel %vm394, %v430, %v431
      %v433 = vrot.slane %v315, 1
      %v434 = vsel %vm394, %v431, %v433
      %v435 = vrot.slane %v316, 1
      %v436 = vrot.slane %v317, 1
      %v437 = vsel %vm394, %v435, %v436
      %v438 = vrot.slane %v318, 1
      %v439 = vsel %vm394, %v436, %v438
      %v440 = vrot.slane %v319, 1
      %v441 = vrot.slane %v320, 1
      %v442 = vsel %vm394, %v440, %v441
      %v443 = vrot.slane %v321, 1
      %v444 = vsel %vm394, %v441, %v443
      %v445 = vrot.slane %v322, 1
      %v446 = vrot.slane %v323, 1
      %v447 = vsel %vm394, %v445, %v446
      %v448 = vrot.slane %v324, 1
      %v449 = vsel %vm394, %v446, %v448
      %v450 = vrot.slane %v325, 1
      %v451 = vrot.slane %v326, 1
      %v452 = vsel %vm394, %v450, %v451
      %v453 = vrot.slane %v327, 1
      %v454 = vsel %vm394, %v451, %v453
      %v455 = vrot.slane %v328, 1
      %v456 = vrot.slane %v329, 1
      %v457 = vsel %vm394, %v455, %v456
      %v458 = vrot.slane %v330, 1
      %v459 = vsel %vm394, %v456, %v458
      %v460 = vrot.slane %v331, 1
      %v461 = vrot.slane %v332, 1
      %v462 = vsel %vm394, %v460, %v461
      %v463 = vrot.slane %v333, 1
      %v464 = vsel %vm394, %v461, %v463
      %v465 = vrot.slane %v334, 1
      %v466 = vrot.slane %v335, 1
      %v467 = vsel %vm394, %v465, %v466
      %v468 = vrot.slane %v336, 1
      %v469 = vsel %vm394, %v466, %v468
      %v470 = vrot.slane %v337, 1
      %v471 = vrot.slane %v338, 1
      %v472 = vsel %vm394, %v470, %v471
      %v473 = vrot.slane %v339, 1
      %v474 = vsel %vm394, %v471, %v473
      %475 = vrot.lane.b32.xlu0 %v397, 4
      %v476 = vpop.permute.xlu0 %475
      %477 = vrot.lane.b32.xlu0 %v399, 4
      %v478 = vpop.permute.xlu0 %477
      %479 = vrot.lane.b32.xlu0 %v402, 4
      %v480 = vpop.permute.xlu0 %479
      %481 = vrot.lane.b32.xlu0 %v404, 4
      %v482 = vpop.permute.xlu0 %481
      %483 = vrot.lane.b32.xlu0 %v407, 4
      %v484 = vpop.permute.xlu0 %483
      %485 = vrot.lane.b32.xlu0 %v409, 4
      %v486 = vpop.permute.xlu0 %485
      %487 = vrot.lane.b32.xlu0 %v412, 4
      %v488 = vpop.permute.xlu0 %487
      %489 = vrot.lane.b32.xlu0 %v414, 4
      %v490 = vpop.permute.xlu0 %489
      %491 = vrot.lane.b32.xlu0 %v417, 4
      %v492 = vpop.permute.xlu0 %491
      %493 = vrot.lane.b32.xlu0 %v419, 4
      %v494 = vpop.permute.xlu0 %493
      %495 = vrot.lane.b32.xlu0 %v422, 4
      %v496 = vpop.permute.xlu0 %495
      %497 = vrot.lane.b32.xlu0 %v424, 4
      %v498 = vpop.permute.xlu0 %497
      %499 = vrot.lane.b32.xlu0 %v427, 4
      %v500 = vpop.permute.xlu0 %499
      %501 = vrot.lane.b32.xlu0 %v429, 4
      %v502 = vpop.permute.xlu0 %501
      %503 = vrot.lane.b32.xlu0 %v432, 4
      %v504 = vpop.permute.xlu0 %503
      %505 = vrot.lane.b32.xlu0 %v434, 4
      %v506 = vpop.permute.xlu0 %505
      %507 = vrot.lane.b32.xlu0 %v437, 4
      %v508 = vpop.permute.xlu0 %507
      %509 = vrot.lane.b32.xlu0 %v439, 4
      %v510 = vpop.permute.xlu0 %509
      %511 = vrot.lane.b32.xlu0 %v442, 4
      %v512 = vpop.permute.xlu0 %511
      %513 = vrot.lane.b32.xlu0 %v444, 4
      %v514 = vpop.permute.xlu0 %513
      %515 = vrot.lane.b32.xlu0 %v447, 4
      %v516 = vpop.permute.xlu0 %515
      %517 = vrot.lane.b32.xlu0 %v449, 4
      %v518 = vpop.permute.xlu0 %517
      %519 = vrot.lane.b32.xlu0 %v452, 4
      %v520 = vpop.permute.xlu0 %519
      %521 = vrot.lane.b32.xlu0 %v454, 4
      %v522 = vpop.permute.xlu0 %521
      %523 = vrot.lane.b32.xlu0 %v457, 4
      %v524 = vpop.permute.xlu0 %523
      %525 = vrot.lane.b32.xlu0 %v459, 4
      %v526 = vpop.permute.xlu0 %525
      %527 = vrot.lane.b32.xlu0 %v462, 4
      %v528 = vpop.permute.xlu0 %527
      %529 = vrot.lane.b32.xlu0 %v464, 4
      %v530 = vpop.permute.xlu0 %529
      %531 = vrot.lane.b32.xlu0 %v467, 4
      %v532 = vpop.permute.xlu0 %531
      %533 = vrot.lane.b32.xlu0 %v469, 4
      %v534 = vpop.permute.xlu0 %533
      %535 = vrot.lane.b32.xlu0 %v472, 4
      %v536 = vpop.permute.xlu0 %535
      %537 = vrot.lane.b32.xlu0 %v474, 4
      %v538 = vpop.permute.xlu0 %537
      %vm571 = vcmask 1045504
      %v572 = vrot.slane %v292, 2
      %v573 = vrot.slane %v293, 2
      %v574 = vsel %vm571, %v572, %v573
      %v575 = vrot.slane %v294, 2
      %v576 = vsel %vm571, %v573, %v575
      %v577 = vrot.slane %v295, 2
      %v578 = vrot.slane %v296, 2
      %v579 = vsel %vm571, %v577, %v578
      %v580 = vrot.slane %v297, 2
      %v581 = vsel %vm571, %v578, %v580
      %v582 = vrot.slane %v298, 2
      %v583 = vrot.slane %v299, 2
      %v584 = vsel %vm571, %v582, %v583
      %v585 = vrot.slane %v300, 2
      %v586 = vsel %vm571, %v583, %v585
      %v587 = vrot.slane %v301, 2
      %v588 = vrot.slane %v302, 2
      %v589 = vsel %vm571, %v587, %v588
      %v590 = vrot.slane %v303, 2
      %v591 = vsel %vm571, %v588, %v590
      %v592 = vrot.slane %v304, 2
      %v593 = vrot.slane %v305, 2
      %v594 = vsel %vm571, %v592, %v593
      %v595 = vrot.slane %v306, 2
      %v596 = vsel %vm571, %v593, %v595
      %v597 = vrot.slane %v307, 2
      %v598 = vrot.slane %v308, 2
      %v599 = vsel %vm571, %v597, %v598
      %v600 = vrot.slane %v309, 2
      %v601 = vsel %vm571, %v598, %v600
      %v602 = vrot.slane %v310, 2
      %v603 = vrot.slane %v311, 2
      %v604 = vsel %vm571, %v602, %v603
      %v605 = vrot.slane %v312, 2
      %v606 = vsel %vm571, %v603, %v605
      %v607 = vrot.slane %v313, 2
      %v608 = vrot.slane %v314, 2
      %v609 = vsel %vm571, %v607, %v608
      %v610 = vrot.slane %v315, 2
      %v611 = vsel %vm571, %v608, %v610
      %v612 = vrot.slane %v316, 2
      %v613 = vrot.slane %v317, 2
      %v614 = vsel %vm571, %v612, %v613
      %v615 = vrot.slane %v318, 2
      %v616 = vsel %vm571, %v613, %v615
      %v617 = vrot.slane %v319, 2
      %v618 = vrot.slane %v320, 2
      %v619 = vsel %vm571, %v617, %v618
      %v620 = vrot.slane %v321, 2
      %v621 = vsel %vm571, %v618, %v620
      %v622 = vrot.slane %v322, 2
      %v623 = vrot.slane %v323, 2
      %v624 = vsel %vm571, %v622, %v623
      %v625 = vrot.slane %v324, 2
      %v626 = vsel %vm571, %v623, %v625
      %v627 = vrot.slane %v325, 2
      %v628 = vrot.slane %v326, 2
      %v629 = vsel %vm571, %v627, %v628
      %v630 = vrot.slane %v327, 2
      %v631 = vsel %vm571, %v628, %v630
      %v632 = vrot.slane %v328, 2
      %v633 = vrot.slane %v329, 2
      %v634 = vsel %vm571, %v632, %v633
      %v635 = vrot.slane %v330, 2
      %v636 = vsel %vm571, %v633, %v635
      %v637 = vrot.slane %v331, 2
      %v638 = vrot.slane %v332, 2
      %v639 = vsel %vm571, %v637, %v638
      %v640 = vrot.slane %v333, 2
      %v641 = vsel %vm571, %v638, %v640
      %v642 = vrot.slane %v334, 2
      %v643 = vrot.slane %v335, 2
      %v644 = vsel %vm571, %v642, %v643
      %v645 = vrot.slane %v336, 2
      %v646 = vsel %vm571, %v643, %v645
      %v647 = vrot.slane %v337, 2
      %v648 = vrot.slane %v338, 2
      %v649 = vsel %vm571, %v647, %v648
      %v650 = vrot.slane %v339, 2
      %v651 = vsel %vm571, %v648, %v650
      %652 = vrot.lane.b32.xlu0 %v574, 8
      %v653 = vpop.permute.xlu0 %652
      %654 = vrot.lane.b32.xlu0 %v576, 8
      %v655 = vpop.permute.xlu0 %654
      %656 = vrot.lane.b32.xlu0 %v579, 8
      %v657 = vpop.permute.xlu0 %656
      %658 = vrot.lane.b32.xlu0 %v581, 8
      %v659 = vpop.permute.xlu0 %658
      %660 = vrot.lane.b32.xlu0 %v584, 8
      %v661 = vpop.permute.xlu0 %660
      %662 = vrot.lane.b32.xlu0 %v586, 8
      %v663 = vpop.permute.xlu0 %662
      %664 = vrot.lane.b32.xlu0 %v589, 8
      %v665 = vpop.permute.xlu0 %664
      %666 = vrot.lane.b32.xlu0 %v591, 8
      %v667 = vpop.permute.xlu0 %666
      %668 = vrot.lane.b32.xlu0 %v594, 8
      %v669 = vpop.permute.xlu0 %668
      %670 = vrot.lane.b32.xlu0 %v596, 8
      %v671 = vpop.permute.xlu0 %670
      %672 = vrot.lane.b32.xlu0 %v599, 8
      %v673 = vpop.permute.xlu0 %672
      %674 = vrot.lane.b32.xlu0 %v601, 8
      %v675 = vpop.permute.xlu0 %674
      %676 = vrot.lane.b32.xlu0 %v604, 8
      %v677 = vpop.permute.xlu0 %676
      %678 = vrot.lane.b32.xlu0 %v606, 8
      %v679 = vpop.permute.xlu0 %678
      %680 = vrot.lane.b32.xlu0 %v609, 8
      %v681 = vpop.permute.xlu0 %680
      %682 = vrot.lane.b32.xlu0 %v611, 8
      %v683 = vpop.permute.xlu0 %682
      %684 = vrot.lane.b32.xlu0 %v614, 8
      %v685 = vpop.permute.xlu0 %684
      %686 = vrot.lane.b32.xlu0 %v616, 8
      %v687 = vpop.permute.xlu0 %686
      %688 = vrot.lane.b32.xlu0 %v619, 8
      %v689 = vpop.permute.xlu0 %688
      %690 = vrot.lane.b32.xlu0 %v621, 8
      %v691 = vpop.permute.xlu0 %690
      %692 = vrot.lane.b32.xlu0 %v624, 8
      %v693 = vpop.permute.xlu0 %692
      %694 = vrot.lane.b32.xlu0 %v626, 8
      %v695 = vpop.permute.xlu0 %694
      %696 = vrot.lane.b32.xlu0 %v629, 8
      %v697 = vpop.permute.xlu0 %696
      %698 = vrot.lane.b32.xlu0 %v631, 8
      %v699 = vpop.permute.xlu0 %698
      %700 = vrot.lane.b32.xlu0 %v634, 8
      %v701 = vpop.permute.xlu0 %700
      %702 = vrot.lane.b32.xlu0 %v636, 8
      %v703 = vpop.permute.xlu0 %702
      %704 = vrot.lane.b32.xlu0 %v639, 8
      %v705 = vpop.permute.xlu0 %704
      %706 = vrot.lane.b32.xlu0 %v641, 8
      %v707 = vpop.permute.xlu0 %706
      %708 = vrot.lane.b32.xlu0 %v644, 8
      %v709 = vpop.permute.xlu0 %708
      %710 = vrot.lane.b32.xlu0 %v646, 8
      %v711 = vpop.permute.xlu0 %710
      %712 = vrot.lane.b32.xlu0 %v649, 8
      %v713 = vpop.permute.xlu0 %712
      %714 = vrot.lane.b32.xlu0 %v651, 8
      %v715 = vpop.permute.xlu0 %714
      %750 = vrot.lane.b32.xlu0 %v295, 12
      %v751 = vpop.permute.xlu0 %750
      %752 = vrot.lane.b32.xlu0 %v296, 12
      %v753 = vpop.permute.xlu0 %752
      %754 = vrot.lane.b32.xlu0 %v298, 12
      %v755 = vpop.permute.xlu0 %754
      %756 = vrot.lane.b32.xlu0 %v299, 12
      %v757 = vpop.permute.xlu0 %756
      %758 = vrot.lane.b32.xlu0 %v301, 12
      %v759 = vpop.permute.xlu0 %758
      %760 = vrot.lane.b32.xlu0 %v302, 12
      %v761 = vpop.permute.xlu0 %760
      %762 = vrot.lane.b32.xlu0 %v304, 12
      %v763 = vpop.permute.xlu0 %762
      %764 = vrot.lane.b32.xlu0 %v305, 12
      %v765 = vpop.permute.xlu0 %764
      %766 = vrot.lane.b32.xlu0 %v307, 12
      %v767 = vpop.permute.xlu0 %766
      %768 = vrot.lane.b32.xlu0 %v308, 12
      %v769 = vpop.permute.xlu0 %768
      %770 = vrot.lane.b32.xlu0 %v310, 12
      %v771 = vpop.permute.xlu0 %770
      %772 = vrot.lane.b32.xlu0 %v311, 12
      %v773 = vpop.permute.xlu0 %772
      %774 = vrot.lane.b32.xlu0 %v313, 12
      %v775 = vpop.permute.xlu0 %774
      %776 = vrot.lane.b32.xlu0 %v314, 12
      %v777 = vpop.permute.xlu0 %776
      %778 = vrot.lane.b32.xlu0 %v316, 12
      %v779 = vpop.permute.xlu0 %778
      %780 = vrot.lane.b32.xlu0 %v317, 12
      %v781 = vpop.permute.xlu0 %780
      %782 = vrot.lane.b32.xlu0 %v319, 12
      %v783 = vpop.permute.xlu0 %782
      %784 = vrot.lane.b32.xlu0 %v320, 12
      %v785 = vpop.permute.xlu0 %784
      %786 = vrot.lane.b32.xlu0 %v322, 12
      %v787 = vpop.permute.xlu0 %786
      %788 = vrot.lane.b32.xlu0 %v323, 12
      %v789 = vpop.permute.xlu0 %788
      %790 = vrot.lane.b32.xlu0 %v325, 12
      %v791 = vpop.permute.xlu0 %790
      %792 = vrot.lane.b32.xlu0 %v326, 12
      %v793 = vpop.permute.xlu0 %792
      %794 = vrot.lane.b32.xlu0 %v328, 12
      %v795 = vpop.permute.xlu0 %794
      %796 = vrot.lane.b32.xlu0 %v329, 12
      %v797 = vpop.permute.xlu0 %796
      %798 = vrot.lane.b32.xlu0 %v331, 12
      %v799 = vpop.permute.xlu0 %798
      %800 = vrot.lane.b32.xlu0 %v332, 12
      %v801 = vpop.permute.xlu0 %800
      %802 = vrot.lane.b32.xlu0 %v334, 12
      %v803 = vpop.permute.xlu0 %802
      %804 = vrot.lane.b32.xlu0 %v335, 12
      %v805 = vpop.permute.xlu0 %804
      %806 = vrot.lane.b32.xlu0 %v337, 12
      %v807 = vpop.permute.xlu0 %806
      %808 = vrot.lane.b32.xlu0 %v338, 12
      %v809 = vpop.permute.xlu0 %808
      %810 = vrot.lane.b32.xlu0 %v340, 12
      %v811 = vpop.permute.xlu0 %810
      %812 = vrot.lane.b32.xlu0 %v341, 12
      %v813 = vpop.permute.xlu0 %812
      %v847 = vrot.slane %v340, 1
      %v848 = vrot.slane %v341, 1
      %v849 = vsel %vm394, %v847, %v848
      %v850 = vrot.slane %v342, 1
      %v851 = vsel %vm394, %v848, %v850
      %852 = vrot.lane.b32.xlu0 %v402, 16
      %v853 = vpop.permute.xlu0 %852
      %854 = vrot.lane.b32.xlu0 %v404, 16
      %v855 = vpop.permute.xlu0 %854
      %856 = vrot.lane.b32.xlu0 %v407, 16
      %v857 = vpop.permute.xlu0 %856
      %858 = vrot.lane.b32.xlu0 %v409, 16
      %v859 = vpop.permute.xlu0 %858
      %860 = vrot.lane.b32.xlu0 %v412, 16
      %v861 = vpop.permute.xlu0 %860
      %862 = vrot.lane.b32.xlu0 %v414, 16
      %v863 = vpop.permute.xlu0 %862
      %864 = vrot.lane.b32.xlu0 %v417, 16
      %v865 = vpop.permute.xlu0 %864
      %866 = vrot.lane.b32.xlu0 %v419, 16
      %v867 = vpop.permute.xlu0 %866
      %868 = vrot.lane.b32.xlu0 %v422, 16
      %v869 = vpop.permute.xlu0 %868
      %870 = vrot.lane.b32.xlu0 %v424, 16
      %v871 = vpop.permute.xlu0 %870
      %872 = vrot.lane.b32.xlu0 %v427, 16
      %v873 = vpop.permute.xlu0 %872
      %874 = vrot.lane.b32.xlu0 %v429, 16
      %v875 = vpop.permute.xlu0 %874
      %876 = vrot.lane.b32.xlu0 %v432, 16
      %v877 = vpop.permute.xlu0 %876
      %878 = vrot.lane.b32.xlu0 %v434, 16
      %v879 = vpop.permute.xlu0 %878
      %880 = vrot.lane.b32.xlu0 %v437, 16
      %v881 = vpop.permute.xlu0 %880
      %882 = vrot.lane.b32.xlu0 %v439, 16
      %v883 = vpop.permute.xlu0 %882
      %884 = vrot.lane.b32.xlu0 %v442, 16
      %v885 = vpop.permute.xlu0 %884
      %886 = vrot.lane.b32.xlu0 %v444, 16
      %v887 = vpop.permute.xlu0 %886
      %888 = vrot.lane.b32.xlu0 %v447, 16
      %v889 = vpop.permute.xlu0 %888
      %890 = vrot.lane.b32.xlu0 %v449, 16
      %v891 = vpop.permute.xlu0 %890
      %892 = vrot.lane.b32.xlu0 %v452, 16
      %v893 = vpop.permute.xlu0 %892
      %894 = vrot.lane.b32.xlu0 %v454, 16
      %v895 = vpop.permute.xlu0 %894
      %896 = vrot.lane.b32.xlu0 %v457, 16
      %v897 = vpop.permute.xlu0 %896
      %898 = vrot.lane.b32.xlu0 %v459, 16
      %v899 = vpop.permute.xlu0 %898
      %900 = vrot.lane.b32.xlu0 %v462, 16
      %v901 = vpop.permute.xlu0 %900
      %902 = vrot.lane.b32.xlu0 %v464, 16
      %v903 = vpop.permute.xlu0 %902
      %904 = vrot.lane.b32.xlu0 %v467, 16
      %v905 = vpop.permute.xlu0 %904
      %906 = vrot.lane.b32.xlu0 %v469, 16
      %v907 = vpop.permute.xlu0 %906
      %908 = vrot.lane.b32.xlu0 %v472, 16
      %v909 = vpop.permute.xlu0 %908
      %910 = vrot.lane.b32.xlu0 %v474, 16
      %v911 = vpop.permute.xlu0 %910
      %912 = vrot.lane.b32.xlu0 %v849, 16
      %v913 = vpop.permute.xlu0 %912
      %914 = vrot.lane.b32.xlu0 %v851, 16
      %v915 = vpop.permute.xlu0 %914
      %v948 = vrot.slane %v340, 2
      %v949 = vrot.slane %v341, 2
      %v950 = vsel %vm571, %v948, %v949
      %v951 = vrot.slane %v342, 2
      %v952 = vsel %vm571, %v949, %v951
      %953 = vrot.lane.b32.xlu0 %v579, 20
      %v954 = vpop.permute.xlu0 %953
      %955 = vrot.lane.b32.xlu0 %v581, 20
      %v956 = vpop.permute.xlu0 %955
      %957 = vrot.lane.b32.xlu0 %v584, 20
      %v958 = vpop.permute.xlu0 %957
      %959 = vrot.lane.b32.xlu0 %v586, 20
      %v960 = vpop.permute.xlu0 %959
      %961 = vrot.lane.b32.xlu0 %v589, 20
      %v962 = vpop.permute.xlu0 %961
      %963 = vrot.lane.b32.xlu0 %v591, 20
      %v964 = vpop.permute.xlu0 %963
      %965 = vrot.lane.b32.xlu0 %v594, 20
      %v966 = vpop.permute.xlu0 %965
      %967 = vrot.lane.b32.xlu0 %v596, 20
      %v968 = vpop.permute.xlu0 %967
      %969 = vrot.lane.b32.xlu0 %v599, 20
      %v970 = vpop.permute.xlu0 %969
      %971 = vrot.lane.b32.xlu0 %v601, 20
      %v972 = vpop.permute.xlu0 %971
      %973 = vrot.lane.b32.xlu0 %v604, 20
      %v974 = vpop.permute.xlu0 %973
      %975 = vrot.lane.b32.xlu0 %v606, 20
      %v976 = vpop.permute.xlu0 %975
      %977 = vrot.lane.b32.xlu0 %v609, 20
      %v978 = vpop.permute.xlu0 %977
      %979 = vrot.lane.b32.xlu0 %v611, 20
      %v980 = vpop.permute.xlu0 %979
      %981 = vrot.lane.b32.xlu0 %v614, 20
      %v982 = vpop.permute.xlu0 %981
      %983 = vrot.lane.b32.xlu0 %v616, 20
      %v984 = vpop.permute.xlu0 %983
      %985 = vrot.lane.b32.xlu0 %v619, 20
      %v986 = vpop.permute.xlu0 %985
      %987 = vrot.lane.b32.xlu0 %v621, 20
      %v988 = vpop.permute.xlu0 %987
      %989 = vrot.lane.b32.xlu0 %v624, 20
      %v990 = vpop.permute.xlu0 %989
      %991 = vrot.lane.b32.xlu0 %v626, 20
      %v992 = vpop.permute.xlu0 %991
      %993 = vrot.lane.b32.xlu0 %v629, 20
      %v994 = vpop.permute.xlu0 %993
      %995 = vrot.lane.b32.xlu0 %v631, 20
      %v996 = vpop.permute.xlu0 %995
      %997 = vrot.lane.b32.xlu0 %v634, 20
      %v998 = vpop.permute.xlu0 %997
      %999 = vrot.lane.b32.xlu0 %v636, 20
      %v1000 = vpop.permute.xlu0 %999
      %1001 = vrot.lane.b32.xlu0 %v639, 20
      %v1002 = vpop.permute.xlu0 %1001
      %1003 = vrot.lane.b32.xlu0 %v641, 20
      %v1004 = vpop.permute.xlu0 %1003
      %1005 = vrot.lane.b32.xlu0 %v644, 20
      %v1006 = vpop.permute.xlu0 %1005
      %1007 = vrot.lane.b32.xlu0 %v646, 20
      %v1008 = vpop.permute.xlu0 %1007
      %1009 = vrot.lane.b32.xlu0 %v649, 20
      %v1010 = vpop.permute.xlu0 %1009
      %1011 = vrot.lane.b32.xlu0 %v651, 20
      %v1012 = vpop.permute.xlu0 %1011
      %1013 = vrot.lane.b32.xlu0 %v950, 20
      %v1014 = vpop.permute.xlu0 %1013
      %1015 = vrot.lane.b32.xlu0 %v952, 20
      %v1016 = vpop.permute.xlu0 %1015
      %1051 = vrot.lane.b32.xlu0 %v298, 24
      %v1052 = vpop.permute.xlu0 %1051
      %1053 = vrot.lane.b32.xlu0 %v299, 24
      %v1054 = vpop.permute.xlu0 %1053
      %1055 = vrot.lane.b32.xlu0 %v301, 24
      %v1056 = vpop.permute.xlu0 %1055
      %1057 = vrot.lane.b32.xlu0 %v302, 24
      %v1058 = vpop.permute.xlu0 %1057
      %1059 = vrot.lane.b32.xlu0 %v304, 24
      %v1060 = vpop.permute.xlu0 %1059
      %1061 = vrot.lane.b32.xlu0 %v305, 24
      %v1062 = vpop.permute.xlu0 %1061
      %1063 = vrot.lane.b32.xlu0 %v307, 24
      %v1064 = vpop.permute.xlu0 %1063
      %1065 = vrot.lane.b32.xlu0 %v308, 24
      %v1066 = vpop.permute.xlu0 %1065
      %1067 = vrot.lane.b32.xlu0 %v310, 24
      %v1068 = vpop.permute.xlu0 %1067
      %1069 = vrot.lane.b32.xlu0 %v311, 24
      %v1070 = vpop.permute.xlu0 %1069
      %1071 = vrot.lane.b32.xlu0 %v313, 24
      %v1072 = vpop.permute.xlu0 %1071
      %1073 = vrot.lane.b32.xlu0 %v314, 24
      %v1074 = vpop.permute.xlu0 %1073
      %1075 = vrot.lane.b32.xlu0 %v316, 24
      %v1076 = vpop.permute.xlu0 %1075
      %1077 = vrot.lane.b32.xlu0 %v317, 24
      %v1078 = vpop.permute.xlu0 %1077
      %1079 = vrot.lane.b32.xlu0 %v319, 24
      %v1080 = vpop.permute.xlu0 %1079
      %1081 = vrot.lane.b32.xlu0 %v320, 24
      %v1082 = vpop.permute.xlu0 %1081
      %1083 = vrot.lane.b32.xlu0 %v322, 24
      %v1084 = vpop.permute.xlu0 %1083
      %1085 = vrot.lane.b32.xlu0 %v323, 24
      %v1086 = vpop.permute.xlu0 %1085
      %1087 = vrot.lane.b32.xlu0 %v325, 24
      %v1088 = vpop.permute.xlu0 %1087
      %1089 = vrot.lane.b32.xlu0 %v326, 24
      %v1090 = vpop.permute.xlu0 %1089
      %1091 = vrot.lane.b32.xlu0 %v328, 24
      %v1092 = vpop.permute.xlu0 %1091
      %1093 = vrot.lane.b32.xlu0 %v329, 24
      %v1094 = vpop.permute.xlu0 %1093
      %1095 = vrot.lane.b32.xlu0 %v331, 24
      %v1096 = vpop.permute.xlu0 %1095
      %1097 = vrot.lane.b32.xlu0 %v332, 24
      %v1098 = vpop.permute.xlu0 %1097
      %1099 = vrot.lane.b32.xlu0 %v334, 24
      %v1100 = vpop.permute.xlu0 %1099
      %1101 = vrot.lane.b32.xlu0 %v335, 24
      %v1102 = vpop.permute.xlu0 %1101
      %1103 = vrot.lane.b32.xlu0 %v337, 24
      %v1104 = vpop.permute.xlu0 %1103
      %1105 = vrot.lane.b32.xlu0 %v338, 24
      %v1106 = vpop.permute.xlu0 %1105
      %1107 = vrot.lane.b32.xlu0 %v340, 24
      %v1108 = vpop.permute.xlu0 %1107
      %1109 = vrot.lane.b32.xlu0 %v341, 24
      %v1110 = vpop.permute.xlu0 %1109
      %1111 = vrot.lane.b32.xlu0 %v343, 24
      %v1112 = vpop.permute.xlu0 %1111
      %1113 = vrot.lane.b32.xlu0 %v344, 24
      %v1114 = vpop.permute.xlu0 %1113
      %v1148 = vrot.slane %v343, 1
      %v1149 = vrot.slane %v344, 1
      %v1150 = vsel %vm394, %v1148, %v1149
      %v1151 = vrot.slane %v345, 1
      %v1152 = vsel %vm394, %v1149, %v1151
      %1153 = vrot.lane.b32.xlu0 %v407, 28
      %v1154 = vpop.permute.xlu0 %1153
      %1155 = vrot.lane.b32.xlu0 %v409, 28
      %v1156 = vpop.permute.xlu0 %1155
      %1157 = vrot.lane.b32.xlu0 %v412, 28
      %v1158 = vpop.permute.xlu0 %1157
      %1159 = vrot.lane.b32.xlu0 %v414, 28
      %v1160 = vpop.permute.xlu0 %1159
      %1161 = vrot.lane.b32.xlu0 %v417, 28
      %v1162 = vpop.permute.xlu0 %1161
      %1163 = vrot.lane.b32.xlu0 %v419, 28
      %v1164 = vpop.permute.xlu0 %1163
      %1165 = vrot.lane.b32.xlu0 %v422, 28
      %v1166 = vpop.permute.xlu0 %1165
      %1167 = vrot.lane.b32.xlu0 %v424, 28
      %v1168 = vpop.permute.xlu0 %1167
      %1169 = vrot.lane.b32.xlu0 %v427, 28
      %v1170 = vpop.permute.xlu0 %1169
      %1171 = vrot.lane.b32.xlu0 %v429, 28
      %v1172 = vpop.permute.xlu0 %1171
      %1173 = vrot.lane.b32.xlu0 %v432, 28
      %v1174 = vpop.permute.xlu0 %1173
      %1175 = vrot.lane.b32.xlu0 %v434, 28
      %v1176 = vpop.permute.xlu0 %1175
      %1177 = vrot.lane.b32.xlu0 %v437, 28
      %v1178 = vpop.permute.xlu0 %1177
      %1179 = vrot.lane.b32.xlu0 %v439, 28
      %v1180 = vpop.permute.xlu0 %1179
      %1181 = vrot.lane.b32.xlu0 %v442, 28
      %v1182 = vpop.permute.xlu0 %1181
      %1183 = vrot.lane.b32.xlu0 %v444, 28
      %v1184 = vpop.permute.xlu0 %1183
      %1185 = vrot.lane.b32.xlu0 %v447, 28
      %v1186 = vpop.permute.xlu0 %1185
      %1187 = vrot.lane.b32.xlu0 %v449, 28
      %v1188 = vpop.permute.xlu0 %1187
      %1189 = vrot.lane.b32.xlu0 %v452, 28
      %v1190 = vpop.permute.xlu0 %1189
      %1191 = vrot.lane.b32.xlu0 %v454, 28
      %v1192 = vpop.permute.xlu0 %1191
      %1193 = vrot.lane.b32.xlu0 %v457, 28
      %v1194 = vpop.permute.xlu0 %1193
      %1195 = vrot.lane.b32.xlu0 %v459, 28
      %v1196 = vpop.permute.xlu0 %1195
      %1197 = vrot.lane.b32.xlu0 %v462, 28
      %v1198 = vpop.permute.xlu0 %1197
      %1199 = vrot.lane.b32.xlu0 %v464, 28
      %v1200 = vpop.permute.xlu0 %1199
      %1201 = vrot.lane.b32.xlu0 %v467, 28
      %v1202 = vpop.permute.xlu0 %1201
      %1203 = vrot.lane.b32.xlu0 %v469, 28
      %v1204 = vpop.permute.xlu0 %1203
      %1205 = vrot.lane.b32.xlu0 %v472, 28
      %v1206 = vpop.permute.xlu0 %1205
      %1207 = vrot.lane.b32.xlu0 %v474, 28
      %v1208 = vpop.permute.xlu0 %1207
      %1209 = vrot.lane.b32.xlu0 %v849, 28
      %v1210 = vpop.permute.xlu0 %1209
      %1211 = vrot.lane.b32.xlu0 %v851, 28
      %v1212 = vpop.permute.xlu0 %1211
      %1213 = vrot.lane.b32.xlu0 %v1150, 28
      %v1214 = vpop.permute.xlu0 %1213
      %1215 = vrot.lane.b32.xlu0 %v1152, 28
      %v1216 = vpop.permute.xlu0 %1215
      %v1249 = vrot.slane %v343, 2
      %v1250 = vrot.slane %v344, 2
      %v1251 = vsel %vm571, %v1249, %v1250
      %v1252 = vrot.slane %v345, 2
      %v1253 = vsel %vm571, %v1250, %v1252
      %1254 = vrot.lane.b32.xlu0 %v584, 32
      %v1255 = vpop.permute.xlu0 %1254
      %1256 = vrot.lane.b32.xlu0 %v586, 32
      %v1257 = vpop.permute.xlu0 %1256
      %1258 = vrot.lane.b32.xlu0 %v589, 32
      %v1259 = vpop.permute.xlu0 %1258
      %1260 = vrot.lane.b32.xlu0 %v591, 32
      %v1261 = vpop.permute.xlu0 %1260
      %1262 = vrot.lane.b32.xlu0 %v594, 32
      %v1263 = vpop.permute.xlu0 %1262
      %1264 = vrot.lane.b32.xlu0 %v596, 32
      %v1265 = vpop.permute.xlu0 %1264
      %1266 = vrot.lane.b32.xlu0 %v599, 32
      %v1267 = vpop.permute.xlu0 %1266
      %1268 = vrot.lane.b32.xlu0 %v601, 32
      %v1269 = vpop.permute.xlu0 %1268
      %1270 = vrot.lane.b32.xlu0 %v604, 32
      %v1271 = vpop.permute.xlu0 %1270
      %1272 = vrot.lane.b32.xlu0 %v606, 32
      %v1273 = vpop.permute.xlu0 %1272
      %1274 = vrot.lane.b32.xlu0 %v609, 32
      %v1275 = vpop.permute.xlu0 %1274
      %1276 = vrot.lane.b32.xlu0 %v611, 32
      %v1277 = vpop.permute.xlu0 %1276
      %1278 = vrot.lane.b32.xlu0 %v614, 32
      %v1279 = vpop.permute.xlu0 %1278
      %1280 = vrot.lane.b32.xlu0 %v616, 32
      %v1281 = vpop.permute.xlu0 %1280
      %1282 = vrot.lane.b32.xlu0 %v619, 32
      %v1283 = vpop.permute.xlu0 %1282
      %1284 = vrot.lane.b32.xlu0 %v621, 32
      %v1285 = vpop.permute.xlu0 %1284
      %1286 = vrot.lane.b32.xlu0 %v624, 32
      %v1287 = vpop.permute.xlu0 %1286
      %1288 = vrot.lane.b32.xlu0 %v626, 32
      %v1289 = vpop.permute.xlu0 %1288
      %1290 = vrot.lane.b32.xlu0 %v629, 32
      %v1291 = vpop.permute.xlu0 %1290
      %1292 = vrot.lane.b32.xlu0 %v631, 32
      %v1293 = vpop.permute.xlu0 %1292
      %1294 = vrot.lane.b32.xlu0 %v634, 32
      %v1295 = vpop.permute.xlu0 %1294
      %1296 = vrot.lane.b32.xlu0 %v636, 32
      %v1297 = vpop.permute.xlu0 %1296
      %1298 = vrot.lane.b32.xlu0 %v639, 32
      %v1299 = vpop.permute.xlu0 %1298
      %1300 = vrot.lane.b32.xlu0 %v641, 32
      %v1301 = vpop.permute.xlu0 %1300
      %1302 = vrot.lane.b32.xlu0 %v644, 32
      %v1303 = vpop.permute.xlu0 %1302
      %1304 = vrot.lane.b32.xlu0 %v646, 32
      %v1305 = vpop.permute.xlu0 %1304
      %1306 = vrot.lane.b32.xlu0 %v649, 32
      %v1307 = vpop.permute.xlu0 %1306
      %1308 = vrot.lane.b32.xlu0 %v651, 32
      %v1309 = vpop.permute.xlu0 %1308
      %1310 = vrot.lane.b32.xlu0 %v950, 32
      %v1311 = vpop.permute.xlu0 %1310
      %1312 = vrot.lane.b32.xlu0 %v952, 32
      %v1313 = vpop.permute.xlu0 %1312
      %1314 = vrot.lane.b32.xlu0 %v1251, 32
      %v1315 = vpop.permute.xlu0 %1314
      %1316 = vrot.lane.b32.xlu0 %v1253, 32
      %v1317 = vpop.permute.xlu0 %1316
      %v1350 = vsel %vm171, %v292, %v476
      %v1351 = vsel %vm171, %v293, %v478
      %v1352 = vsel %vm171, %v295, %v480
      %v1353 = vsel %vm171, %v296, %v482
      %v1354 = vsel %vm171, %v298, %v484
      %v1355 = vsel %vm171, %v299, %v486
      %v1356 = vsel %vm171, %v301, %v488
      %v1357 = vsel %vm171, %v302, %v490
      %v1358 = vsel %vm171, %v304, %v492
      %v1359 = vsel %vm171, %v305, %v494
      %v1360 = vsel %vm171, %v307, %v496
      %v1361 = vsel %vm171, %v308, %v498
      %v1362 = vsel %vm171, %v310, %v500
      %v1363 = vsel %vm171, %v311, %v502
      %v1364 = vsel %vm171, %v313, %v504
      %v1365 = vsel %vm171, %v314, %v506
      %v1366 = vsel %vm171, %v316, %v508
      %v1367 = vsel %vm171, %v317, %v510
      %v1368 = vsel %vm171, %v319, %v512
      %v1369 = vsel %vm171, %v320, %v514
      %v1370 = vsel %vm171, %v322, %v516
      %v1371 = vsel %vm171, %v323, %v518
      %v1372 = vsel %vm171, %v325, %v520
      %v1373 = vsel %vm171, %v326, %v522
      %v1374 = vsel %vm171, %v328, %v524
      %v1375 = vsel %vm171, %v329, %v526
      %v1376 = vsel %vm171, %v331, %v528
      %v1377 = vsel %vm171, %v332, %v530
      %v1378 = vsel %vm171, %v334, %v532
      %v1379 = vsel %vm171, %v335, %v534
      %v1380 = vsel %vm171, %v337, %v536
      %v1381 = vsel %vm171, %v338, %v538
      %vm1382 = vcmask 64512
      %v1383 = vsel %vm1382, %v1350, %v653
      %v1384 = vsel %vm1382, %v1351, %v655
      %v1385 = vsel %vm1382, %v1352, %v657
      %v1386 = vsel %vm1382, %v1353, %v659
      %v1387 = vsel %vm1382, %v1354, %v661
      %v1388 = vsel %vm1382, %v1355, %v663
      %v1389 = vsel %vm1382, %v1356, %v665
      %v1390 = vsel %vm1382, %v1357, %v667
      %v1391 = vsel %vm1382, %v1358, %v669
      %v1392 = vsel %vm1382, %v1359, %v671
      %v1393 = vsel %vm1382, %v1360, %v673
      %v1394 = vsel %vm1382, %v1361, %v675
      %v1395 = vsel %vm1382, %v1362, %v677
      %v1396 = vsel %vm1382, %v1363, %v679
      %v1397 = vsel %vm1382, %v1364, %v681
      %v1398 = vsel %vm1382, %v1365, %v683
      %v1399 = vsel %vm1382, %v1366, %v685
      %v1400 = vsel %vm1382, %v1367, %v687
      %v1401 = vsel %vm1382, %v1368, %v689
      %v1402 = vsel %vm1382, %v1369, %v691
      %v1403 = vsel %vm1382, %v1370, %v693
      %v1404 = vsel %vm1382, %v1371, %v695
      %v1405 = vsel %vm1382, %v1372, %v697
      %v1406 = vsel %vm1382, %v1373, %v699
      %v1407 = vsel %vm1382, %v1374, %v701
      %v1408 = vsel %vm1382, %v1375, %v703
      %v1409 = vsel %vm1382, %v1376, %v705
      %v1410 = vsel %vm1382, %v1377, %v707
      %v1411 = vsel %vm1382, %v1378, %v709
      %v1412 = vsel %vm1382, %v1379, %v711
      %v1413 = vsel %vm1382, %v1380, %v713
      %v1414 = vsel %vm1382, %v1381, %v715
      %vm1415 = vcmask 97280
      %v1416 = vsel %vm1415, %v1383, %v751
      %v1417 = vsel %vm1415, %v1384, %v753
      %v1418 = vsel %vm1415, %v1385, %v755
      %v1419 = vsel %vm1415, %v1386, %v757
      %v1420 = vsel %vm1415, %v1387, %v759
      %v1421 = vsel %vm1415, %v1388, %v761
      %v1422 = vsel %vm1415, %v1389, %v763
      %v1423 = vsel %vm1415, %v1390, %v765
      %v1424 = vsel %vm1415, %v1391, %v767
      %v1425 = vsel %vm1415, %v1392, %v769
      %v1426 = vsel %vm1415, %v1393, %v771
      %v1427 = vsel %vm1415, %v1394, %v773
      %v1428 = vsel %vm1415, %v1395, %v775
      %v1429 = vsel %vm1415, %v1396, %v777
      %v1430 = vsel %vm1415, %v1397, %v779
      %v1431 = vsel %vm1415, %v1398, %v781
      %v1432 = vsel %vm1415, %v1399, %v783
      %v1433 = vsel %vm1415, %v1400, %v785
      %v1434 = vsel %vm1415, %v1401, %v787
      %v1435 = vsel %vm1415, %v1402, %v789
      %v1436 = vsel %vm1415, %v1403, %v791
      %v1437 = vsel %vm1415, %v1404, %v793
      %v1438 = vsel %vm1415, %v1405, %v795
      %v1439 = vsel %vm1415, %v1406, %v797
      %v1440 = vsel %vm1415, %v1407, %v799
      %v1441 = vsel %vm1415, %v1408, %v801
      %v1442 = vsel %vm1415, %v1409, %v803
      %v1443 = vsel %vm1415, %v1410, %v805
      %v1444 = vsel %vm1415, %v1411, %v807
      %v1445 = vsel %vm1415, %v1412, %v809
      %v1446 = vsel %vm1415, %v1413, %v811
      %v1447 = vsel %vm1415, %v1414, %v813
      %vm1448 = vcmask 130048
      %v1449 = vsel %vm1448, %v1416, %v853
      %v1450 = vsel %vm1448, %v1417, %v855
      %v1451 = vsel %vm1448, %v1418, %v857
      %v1452 = vsel %vm1448, %v1419, %v859
      %v1453 = vsel %vm1448, %v1420, %v861
      %v1454 = vsel %vm1448, %v1421, %v863
      %v1455 = vsel %vm1448, %v1422, %v865
      %v1456 = vsel %vm1448, %v1423, %v867
      %v1457 = vsel %vm1448, %v1424, %v869
      %v1458 = vsel %vm1448, %v1425, %v871
      %v1459 = vsel %vm1448, %v1426, %v873
      %v1460 = vsel %vm1448, %v1427, %v875
      %v1461 = vsel %vm1448, %v1428, %v877
      %v1462 = vsel %vm1448, %v1429, %v879
      %v1463 = vsel %vm1448, %v1430, %v881
      %v1464 = vsel %vm1448, %v1431, %v883
      %v1465 = vsel %vm1448, %v1432, %v885
      %v1466 = vsel %vm1448, %v1433, %v887
      %v1467 = vsel %vm1448, %v1434, %v889
      %v1468 = vsel %vm1448, %v1435, %v891
      %v1469 = vsel %vm1448, %v1436, %v893
      %v1470 = vsel %vm1448, %v1437, %v895
      %v1471 = vsel %vm1448, %v1438, %v897
      %v1472 = vsel %vm1448, %v1439, %v899
      %v1473 = vsel %vm1448, %v1440, %v901
      %v1474 = vsel %vm1448, %v1441, %v903
      %v1475 = vsel %vm1448, %v1442, %v905
      %v1476 = vsel %vm1448, %v1443, %v907
      %v1477 = vsel %vm1448, %v1444, %v909
      %v1478 = vsel %vm1448, %v1445, %v911
      %v1479 = vsel %vm1448, %v1446, %v913
      %v1480 = vsel %vm1448, %v1447, %v915
      %vm1481 = vcmask 162816
      %v1482 = vsel %vm1481, %v1449, %v954
      %v1483 = vsel %vm1481, %v1450, %v956
      %v1484 = vsel %vm1481, %v1451, %v958
      %v1485 = vsel %vm1481, %v1452, %v960
      %v1486 = vsel %vm1481, %v1453, %v962
      %v1487 = vsel %vm1481, %v1454, %v964
      %v1488 = vsel %vm1481, %v1455, %v966
      %v1489 = vsel %vm1481, %v1456, %v968
      %v1490 = vsel %vm1481, %v1457, %v970
      %v1491 = vsel %vm1481, %v1458, %v972
      %v1492 = vsel %vm1481, %v1459, %v974
      %v1493 = vsel %vm1481, %v1460, %v976
      %v1494 = vsel %vm1481, %v1461, %v978
      %v1495 = vsel %vm1481, %v1462, %v980
      %v1496 = vsel %vm1481, %v1463, %v982
      %v1497 = vsel %vm1481, %v1464, %v984
      %v1498 = vsel %vm1481, %v1465, %v986
      %v1499 = vsel %vm1481, %v1466, %v988
      %v1500 = vsel %vm1481, %v1467, %v990
      %v1501 = vsel %vm1481, %v1468, %v992
      %v1502 = vsel %vm1481, %v1469, %v994
      %v1503 = vsel %vm1481, %v1470, %v996
      %v1504 = vsel %vm1481, %v1471, %v998
      %v1505 = vsel %vm1481, %v1472, %v1000
      %v1506 = vsel %vm1481, %v1473, %v1002
      %v1507 = vsel %vm1481, %v1474, %v1004
      %v1508 = vsel %vm1481, %v1475, %v1006
      %v1509 = vsel %vm1481, %v1476, %v1008
      %v1510 = vsel %vm1481, %v1477, %v1010
      %v1511 = vsel %vm1481, %v1478, %v1012
      %v1512 = vsel %vm1481, %v1479, %v1014
      %v1513 = vsel %vm1481, %v1480, %v1016
      %vm1514 = vcmask 195584
      %v1515 = vsel %vm1514, %v1482, %v1052
      %v1516 = vsel %vm1514, %v1483, %v1054
      %v1517 = vsel %vm1514, %v1484, %v1056
      %v1518 = vsel %vm1514, %v1485, %v1058
      %v1519 = vsel %vm1514, %v1486, %v1060
      %v1520 = vsel %vm1514, %v1487, %v1062
      %v1521 = vsel %vm1514, %v1488, %v1064
      %v1522 = vsel %vm1514, %v1489, %v1066
      %v1523 = vsel %vm1514, %v1490, %v1068
      %v1524 = vsel %vm1514, %v1491, %v1070
      %v1525 = vsel %vm1514, %v1492, %v1072
      %v1526 = vsel %vm1514, %v1493, %v1074
      %v1527 = vsel %vm1514, %v1494, %v1076
      %v1528 = vsel %vm1514, %v1495, %v1078
      %v1529 = vsel %vm1514, %v1496, %v1080
      %v1530 = vsel %vm1514, %v1497, %v1082
      %v1531 = vsel %vm1514, %v1498, %v1084
      %v1532 = vsel %vm1514, %v1499, %v1086
      %v1533 = vsel %vm1514, %v1500, %v1088
      %v1534 = vsel %vm1514, %v1501, %v1090
      %v1535 = vsel %vm1514, %v1502, %v1092
      %v1536 = vsel %vm1514, %v1503, %v1094
      %v1537 = vsel %vm1514, %v1504, %v1096
      %v1538 = vsel %vm1514, %v1505, %v1098
      %v1539 = vsel %vm1514, %v1506, %v1100
      %v1540 = vsel %vm1514, %v1507, %v1102
      %v1541 = vsel %vm1514, %v1508, %v1104
      %v1542 = vsel %vm1514, %v1509, %v1106
      %v1543 = vsel %vm1514, %v1510, %v1108
      %v1544 = vsel %vm1514, %v1511, %v1110
      %v1545 = vsel %vm1514, %v1512, %v1112
      %v1546 = vsel %vm1514, %v1513, %v1114
      %vm1547 = vcmask 228352
      %v1548 = vsel %vm1547, %v1515, %v1154
      %v1549 = vsel %vm1547, %v1516, %v1156
      %v1550 = vsel %vm1547, %v1517, %v1158
      %v1551 = vsel %vm1547, %v1518, %v1160
      %v1552 = vsel %vm1547, %v1519, %v1162
      %v1553 = vsel %vm1547, %v1520, %v1164
      %v1554 = vsel %vm1547, %v1521, %v1166
      %v1555 = vsel %vm1547, %v1522, %v1168
      %v1556 = vsel %vm1547, %v1523, %v1170
      %v1557 = vsel %vm1547, %v1524, %v1172
      %v1558 = vsel %vm1547, %v1525, %v1174
      %v1559 = vsel %vm1547, %v1526, %v1176
      %v1560 = vsel %vm1547, %v1527, %v1178
      %v1561 = vsel %vm1547, %v1528, %v1180
      %v1562 = vsel %vm1547, %v1529, %v1182
      %v1563 = vsel %vm1547, %v1530, %v1184
      %v1564 = vsel %vm1547, %v1531, %v1186
      %v1565 = vsel %vm1547, %v1532, %v1188
      %v1566 = vsel %vm1547, %v1533, %v1190
      %v1567 = vsel %vm1547, %v1534, %v1192
      %v1568 = vsel %vm1547, %v1535, %v1194
      %v1569 = vsel %vm1547, %v1536, %v1196
      %v1570 = vsel %vm1547, %v1537, %v1198
      %v1571 = vsel %vm1547, %v1538, %v1200
      %v1572 = vsel %vm1547, %v1539, %v1202
      %v1573 = vsel %vm1547, %v1540, %v1204
      %v1574 = vsel %vm1547, %v1541, %v1206
      %v1575 = vsel %vm1547, %v1542, %v1208
      %v1576 = vsel %vm1547, %v1543, %v1210
      %v1577 = vsel %vm1547, %v1544, %v1212
      %v1578 = vsel %vm1547, %v1545, %v1214
      %v1579 = vsel %vm1547, %v1546, %v1216
      %vm1580 = vcmask 261120
      %v1581 = vsel %vm1580, %v1548, %v1255
      %v1582 = vsel %vm1580, %v1549, %v1257
      %v1583 = vsel %vm1580, %v1550, %v1259
      %v1584 = vsel %vm1580, %v1551, %v1261
      %v1585 = vsel %vm1580, %v1552, %v1263
      %v1586 = vsel %vm1580, %v1553, %v1265
      %v1587 = vsel %vm1580, %v1554, %v1267
      %v1588 = vsel %vm1580, %v1555, %v1269
      %v1589 = vsel %vm1580, %v1556, %v1271
      %v1590 = vsel %vm1580, %v1557, %v1273
      %v1591 = vsel %vm1580, %v1558, %v1275
      %v1592 = vsel %vm1580, %v1559, %v1277
      %v1593 = vsel %vm1580, %v1560, %v1279
      %v1594 = vsel %vm1580, %v1561, %v1281
      %v1595 = vsel %vm1580, %v1562, %v1283
      %v1596 = vsel %vm1580, %v1563, %v1285
      %v1597 = vsel %vm1580, %v1564, %v1287
      %v1598 = vsel %vm1580, %v1565, %v1289
      %v1599 = vsel %vm1580, %v1566, %v1291
      %v1600 = vsel %vm1580, %v1567, %v1293
      %v1601 = vsel %vm1580, %v1568, %v1295
      %v1602 = vsel %vm1580, %v1569, %v1297
      %v1603 = vsel %vm1580, %v1570, %v1299
      %v1604 = vsel %vm1580, %v1571, %v1301
      %v1605 = vsel %vm1580, %v1572, %v1303
      %v1606 = vsel %vm1580, %v1573, %v1305
      %v1607 = vsel %vm1580, %v1574, %v1307
      %v1608 = vsel %vm1580, %v1575, %v1309
      %v1609 = vsel %vm1580, %v1576, %v1311
      %v1610 = vsel %vm1580, %v1577, %v1313
      %v1611 = vsel %vm1580, %v1578, %v1315
      %v1612 = vsel %vm1580, %v1579, %v1317
      %v1613 = vld [vmem:[%s1] sm:$0xff]
      %v1614 = vld [vmem:[%s1 + $0x8] sm:$0xff]
      %v1615 = vld [vmem:[%s1 + $0x10] sm:$0xff]
      %v1616 = vld [vmem:[%s1 + $0x18] sm:$0xff]
      %v1617 = vld [vmem:[%s1 + $0x20] sm:$0xf]
      %v1618 = vld [vmem:[%s2] sm:$0x1]
      %v1620 = vlaneseq
      %v1621 = vshrl.u32 %v1620, 7
      %v1622 = vsub.s32 0, %v1621
      %v1623 = vrot.slane %v1618, %v1622
      %vm1625 = vcmask 293888
      %v1627 = vsel %vm1625, %v1581, 0
      %v1630 = vsel %vm1625, %v1582, 0
      %v1633 = vsel %vm1625, %v1583, 0
      %v1636 = vsel %vm1625, %v1584, 0
      %v1639 = vsel %vm1625, %v1585, 0
      %v1642 = vsel %vm1625, %v1586, 0
      %v1645 = vsel %vm1625, %v1587, 0
      %v1648 = vsel %vm1625, %v1588, 0
      %v1651 = vsel %vm1625, %v1589, 0
      %v1654 = vsel %vm1625, %v1590, 0
      %v1657 = vsel %vm1625, %v1591, 0
      %v1660 = vsel %vm1625, %v1592, 0
      %v1663 = vsel %vm1625, %v1593, 0
      %v1666 = vsel %vm1625, %v1594, 0
      %v1669 = vsel %vm1625, %v1595, 0
      %v1672 = vsel %vm1625, %v1596, 0
      %v1675 = vsel %vm1625, %v1597, 0
      %v1678 = vsel %vm1625, %v1598, 0
      %v1681 = vsel %vm1625, %v1599, 0
      %v1684 = vsel %vm1625, %v1600, 0
      %v1687 = vsel %vm1625, %v1601, 0
      %v1690 = vsel %vm1625, %v1602, 0
      %v1693 = vsel %vm1625, %v1603, 0
      %v1696 = vsel %vm1625, %v1604, 0
      %v1699 = vsel %vm1625, %v1605, 0
      %v1702 = vsel %vm1625, %v1606, 0
      %v1705 = vsel %vm1625, %v1607, 0
      %v1708 = vsel %vm1625, %v1608, 0
      %v1711 = vsel %vm1625, %v1609, 0
      %v1714 = vsel %vm1625, %v1610, 0
      %v1717 = vsel %vm1625, %v1611, 0
      %v1720 = vsel %vm1625, %v1612, 0
      %vm1722 = vcmask 1043456
      %v1724 = vsel %vm1722, %v1617, 0
      %1726 = vmatprep.subr.mxu0 0.0
      %1727 = vmatpush1.msra.mxu0 %v1613
      %1728 = vmatprep.subr.mxu0 0.0
      %1729 = vmatpush1.msra.mxu0 %v1614
      %1730 = vmatprep.subr.mxu0 0.0
      %1731 = vmatpush1.msra.mxu0 %v1615
      %1732 = vmatprep.subr.mxu0 0.0
      %1733 = vmatpush1.msra.mxu0 %v1616
      %1734 = vmatprep.subr.mxu0 0.0
      %1735 = vmatpush1.msra.mxu0 %v1724
      %1736 = vmatprep.subr.mxu0 0.0
      %1737 = vmatpush1.msra.mxu0 0.0
      %1738 = vmatprep.subr.mxu0 0.0
      %1739 = vmatpush1.msra.mxu0 0.0
      %1740 = vmatprep.subr.mxu0 0.0
      %1741 = vmatpush1.msra.mxu0 0.0
      %1742 = vmatprep.subr.mxu0 0.0
      %1743 = vmatpush1.msra.mxu0 0.0
      %1744 = vmatprep.subr.mxu0 0.0
      %1745 = vmatpush1.msra.mxu0 0.0
      %1746 = vmatprep.subr.mxu0 0.0
      %1747 = vmatpush1.msra.mxu0 0.0
      %1748 = vmatprep.subr.mxu0 0.0
      %1749 = vmatpush1.msra.mxu0 0.0
      %1750 = vmatprep.subr.mxu0 0.0
      %1751 = vmatpush1.msra.mxu0 0.0
      %1752 = vmatprep.subr.mxu0 0.0
      %1753 = vmatpush1.msra.mxu0 0.0
      %1754 = vmatprep.subr.mxu0 0.0
      %1755 = vmatpush1.msra.mxu0 0.0
      %1756 = vmatprep.subr.mxu0 0.0
      %1757 = vmatpush1.msra.mxu0 0.0
      %1758 = vmatprep.subr.mxu0 0.0
      %1759 = vmatpush1.msra.mxu0 0.0
      %1760 = vmatprep.subr.mxu0 0.0
      %1761 = vmatpush1.msra.mxu0 0.0
      %1762 = vmatprep.subr.mxu0 0.0
      %1763 = vmatpush1.msra.mxu0 0.0
      %1764 = vmatprep.subr.mxu0 0.0
      %1765 = vmatpush1.msra.mxu0 0.0
      %1766 = vmatprep.subr.mxu0 0.0
      %1767 = vmatpush1.msra.mxu0 0.0
      %1768 = vmatprep.subr.mxu0 0.0
      %1769 = vmatpush1.msra.mxu0 0.0
      %1770 = vmatprep.subr.mxu0 0.0
      %1771 = vmatpush1.msra.mxu0 0.0
      %1772 = vmatprep.subr.mxu0 0.0
      %1773 = vmatpush1.msra.mxu0 0.0
      %1774 = vmatprep.subr.mxu0 0.0
      %1775 = vmatpush1.msra.mxu0 0.0
      %1776 = vmatprep.subr.mxu0 0.0
      %1777 = vmatpush1.msra.mxu0 0.0
      %1778 = vmatprep.subr.mxu0 0.0
      %1779 = vmatpush1.msra.mxu0 0.0
      %1780 = vmatprep.subr.mxu0 0.0
      %1781 = vmatpush1.msra.mxu0 0.0
      %1782 = vmatprep.subr.mxu0 0.0
      %1783 = vmatpush1.msra.mxu0 0.0
      %1784 = vmatprep.subr.mxu0 0.0
      %1785 = vmatpush1.msra.mxu0 0.0
      %1786 = vmatprep.subr.mxu0 0.0
      %1787 = vmatpush1.msra.mxu0 0.0
      %1788 = vmatprep.subr.mxu0 0.0
      %1789 = vmatpush1.msra.mxu0 0.0
      %1790 = vmatprep.mubr.f32.mxu0 0.0
      %1791 = vmatmul.mubr.f32.gmra.mrb[0].mxu0 %v1627
      %v1792 = vpop.f32.mrb[0].mxu0
      %v1793 = vadd.f32 %v1623, %v1792
      %v1794 = vpop.f32.mrb[0].mxu0
      %1795 = vmatprep.mubr.f32.mxu0 0.0
      %1796 = vmatmul.mubr.f32.gmra.mrb[0].mxu0 %v1630
      %v1797 = vpop.f32.mrb[0].mxu0
      %v1798 = vadd.f32 %v1623, %v1797
      %v1799 = vpop.f32.mrb[0].mxu0
      %1800 = vmatprep.mubr.f32.mxu0 0.0
      %1801 = vmatmul.mubr.f32.gmra.mrb[0].mxu0 %v1633
      %v1802 = vpop.f32.mrb[0].mxu0
      %v1803 = vadd.f32 %v1623, %v1802
      %v1804 = vpop.f32.mrb[0].mxu0
      %1805 = vmatprep.mubr.f32.mxu0 0.0
      %1806 = vmatmul.mubr.f32.gmra.mrb[0].mxu0 %v1636
      %v1807 = vpop.f32.mrb[0].mxu0
      %v1808 = vadd.f32 %v1623, %v1807
      %v1809 = vpop.f32.mrb[0].mxu0
      %1810 = vmatprep.mubr.f32.mxu0 0.0
      %1811 = vmatmul.mubr.f32.gmra.mrb[0].mxu0 %v1639
      %v1812 = vpop.f32.mrb[0].mxu0
      %v1813 = vadd.f32 %v1623, %v1812
      %v1814 = vpop.f32.mrb[0].mxu0
      %1815 = vmatprep.mubr.f32.mxu0 0.0
      %1816 = vmatmul.mubr.f32.gmra.mrb[0].mxu0 %v1642
      %v1817 = vpop.f32.mrb[0].mxu0
      %v1818 = vadd.f32 %v1623, %v1817
      %v1819 = vpop.f32.mrb[0].mxu0
      %1820 = vmatprep.mubr.f32.mxu0 0.0
      %1821 = vmatmul.mubr.f32.gmra.mrb[0].mxu0 %v1645
      %v1822 = vpop.f32.mrb[0].mxu0
      %v1823 = vadd.f32 %v1623, %v1822
      %v1824 = vpop.f32.mrb[0].mxu0
      %1825 = vmatprep.mubr.f32.mxu0 0.0
      %1826 = vmatmul.mubr.f32.gmra.mrb[0].mxu0 %v1648
      %v1827 = vpop.f32.mrb[0].mxu0
      %v1828 = vadd.f32 %v1623, %v1827
      %v1829 = vpop.f32.mrb[0].mxu0
      %1830 = vmatprep.mubr.f32.mxu0 0.0
      %1831 = vmatmul.mubr.f32.gmra.mrb[0].mxu0 %v1651
      %v1832 = vpop.f32.mrb[0].mxu0
      %v1833 = vadd.f32 %v1623, %v1832
      %v1834 = vpop.f32.mrb[0].mxu0
      %1835 = vmatprep.mubr.f32.mxu0 0.0
      %1836 = vmatmul.mubr.f32.gmra.mrb[0].mxu0 %v1654
      %v1837 = vpop.f32.mrb[0].mxu0
      %v1838 = vadd.f32 %v1623, %v1837
      %v1839 = vpop.f32.mrb[0].mxu0
      %1840 = vmatprep.mubr.f32.mxu0 0.0
      %1841 = vmatmul.mubr.f32.gmra.mrb[0].mxu0 %v1657
      %v1842 = vpop.f32.mrb[0].mxu0
      %v1843 = vadd.f32 %v1623, %v1842
      %v1844 = vpop.f32.mrb[0].mxu0
      %1845 = vmatprep.mubr.f32.mxu0 0.0
      %1846 = vmatmul.mubr.f32.gmra.mrb[0].mxu0 %v1660
      %v1847 = vpop.f32.mrb[0].mxu0
      %v1848 = vadd.f32 %v1623, %v1847
      %v1849 = vpop.f32.mrb[0].mxu0
      %1850 = vmatprep.mubr.f32.mxu0 0.0
      %1851 = vmatmul.mubr.f32.gmra.mrb[0].mxu0 %v1663
      %v1852 = vpop.f32.mrb[0].mxu0
      %v1853 = vadd.f32 %v1623, %v1852
      %v1854 = vpop.f32.mrb[0].mxu0
      %1855 = vmatprep.mubr.f32.mxu0 0.0
      %1856 = vmatmul.mubr.f32.gmra.mrb[0].mxu0 %v1666
      %v1857 = vpop.f32.mrb[0].mxu0
      %v1858 = vadd.f32 %v1623, %v1857
      %v1859 = vpop.f32.mrb[0].mxu0
      %1860 = vmatprep.mubr.f32.mxu0 0.0
      %1861 = vmatmul.mubr.f32.gmra.mrb[0].mxu0 %v1669
      %v1862 = vpop.f32.mrb[0].mxu0
      %v1863 = vadd.f32 %v1623, %v1862
      %v1864 = vpop.f32.mrb[0].mxu0
      %1865 = vmatprep.mubr.f32.mxu0 0.0
      %1866 = vmatmul.mubr.f32.gmra.mrb[0].mxu0 %v1672
      %v1867 = vpop.f32.mrb[0].mxu0
      %v1868 = vadd.f32 %v1623, %v1867
      %v1869 = vpop.f32.mrb[0].mxu0
      %1870 = vmatprep.mubr.f32.mxu0 0.0
      %1871 = vmatmul.mubr.f32.gmra.mrb[0].mxu0 %v1675
      %v1872 = vpop.f32.mrb[0].mxu0
      %v1873 = vadd.f32 %v1623, %v1872
      %v1874 = vpop.f32.mrb[0].mxu0
      %1875 = vmatprep.mubr.f32.mxu0 0.0
      %1876 = vmatmul.mubr.f32.gmra.mrb[0].mxu0 %v1678
      %v1877 = vpop.f32.mrb[0].mxu0
      %v1878 = vadd.f32 %v1623, %v1877
      %v1879 = vpop.f32.mrb[0].mxu0
      %1880 = vmatprep.mubr.f32.mxu0 0.0
      %1881 = vmatmul.mubr.f32.gmra.mrb[0].mxu0 %v1681
      %v1882 = vpop.f32.mrb[0].mxu0
      %v1883 = vadd.f32 %v1623, %v1882
      %v1884 = vpop.f32.mrb[0].mxu0
      %1885 = vmatprep.mubr.f32.mxu0 0.0
      %1886 = vmatmul.mubr.f32.gmra.mrb[0].mxu0 %v1684
      %v1887 = vpop.f32.mrb[0].mxu0
      %v1888 = vadd.f32 %v1623, %v1887
      %v1889 = vpop.f32.mrb[0].mxu0
      %1890 = vmatprep.mubr.f32.mxu0 0.0
      %1891 = vmatmul.mubr.f32.gmra.mrb[0].mxu0 %v1687
      %v1892 = vpop.f32.mrb[0].mxu0
      %v1893 = vadd.f32 %v1623, %v1892
      %v1894 = vpop.f32.mrb[0].mxu0
      %1895 = vmatprep.mubr.f32.mxu0 0.0
      %1896 = vmatmul.mubr.f32.gmra.mrb[0].mxu0 %v1690
      %v1897 = vpop.f32.mrb[0].mxu0
      %v1898 = vadd.f32 %v1623, %v1897
      %v1899 = vpop.f32.mrb[0].mxu0
      %1900 = vmatprep.mubr.f32.mxu0 0.0
      %1901 = vmatmul.mubr.f32.gmra.mrb[0].mxu0 %v1693
      %v1902 = vpop.f32.mrb[0].mxu0
      %v1903 = vadd.f32 %v1623, %v1902
      %v1904 = vpop.f32.mrb[0].mxu0
      %1905 = vmatprep.mubr.f32.mxu0 0.0
      %1906 = vmatmul.mubr.f32.gmra.mrb[0].mxu0 %v1696
      %v1907 = vpop.f32.mrb[0].mxu0
      %v1908 = vadd.f32 %v1623, %v1907
      %v1909 = vpop.f32.mrb[0].mxu0
      %1910 = vmatprep.mubr.f32.mxu0 0.0
      %1911 = vmatmul.mubr.f32.gmra.mrb[0].mxu0 %v1699
      %v1912 = vpop.f32.mrb[0].mxu0
      %v1913 = vadd.f32 %v1623, %v1912
      %v1914 = vpop.f32.mrb[0].mxu0
      %1915 = vmatprep.mubr.f32.mxu0 0.0
      %1916 = vmatmul.mubr.f32.gmra.mrb[0].mxu0 %v1702
      %v1917 = vpop.f32.mrb[0].mxu0
      %v1918 = vadd.f32 %v1623, %v1917
      %v1919 = vpop.f32.mrb[0].mxu0
      %1920 = vmatprep.mubr.f32.mxu0 0.0
      %1921 = vmatmul.mubr.f32.gmra.mrb[0].mxu0 %v1705
      %v1922 = vpop.f32.mrb[0].mxu0
      %v1923 = vadd.f32 %v1623, %v1922
      %v1924 = vpop.f32.mrb[0].mxu0
      %1925 = vmatprep.mubr.f32.mxu0 0.0
      %1926 = vmatmul.mubr.f32.gmra.mrb[0].mxu0 %v1708
      %v1927 = vpop.f32.mrb[0].mxu0
      %v1928 = vadd.f32 %v1623, %v1927
      %v1929 = vpop.f32.mrb[0].mxu0
      %1930 = vmatprep.mubr.f32.mxu0 0.0
      %1931 = vmatmul.mubr.f32.gmra.mrb[0].mxu0 %v1711
      %v1932 = vpop.f32.mrb[0].mxu0
      %v1933 = vadd.f32 %v1623, %v1932
      %v1934 = vpop.f32.mrb[0].mxu0
      %1935 = vmatprep.mubr.f32.mxu0 0.0
      %1936 = vmatmul.mubr.f32.gmra.mrb[0].mxu0 %v1714
      %v1937 = vpop.f32.mrb[0].mxu0
      %v1938 = vadd.f32 %v1623, %v1937
      %v1939 = vpop.f32.mrb[0].mxu0
      %1940 = vmatprep.mubr.f32.mxu0 0.0
      %1941 = vmatmul.mubr.f32.gmra.mrb[0].mxu0 %v1717
      %v1942 = vpop.f32.mrb[0].mxu0
      %v1943 = vadd.f32 %v1623, %v1942
      %v1944 = vpop.f32.mrb[0].mxu0
      %1945 = vmatprep.mubr.f32.mxu0 0.0
      %1946 = vmatmul.mubr.f32.gmra.mrb[0].mxu0 %v1720
      %v1947 = vpop.f32.mrb[0].mxu0
      %v1948 = vadd.f32 %v1623, %v1947
      %v1949 = vpop.f32.mrb[0].mxu0
      %1950 = vdwg.mxu0
      %1951 = vst [vmem:[%s170] sm:$0xff] %v1793
      %1952 = vst [vmem:[%s170 + $0x8] sm:$0xff] %v1798
      %1953 = vst [vmem:[%s170 + $0x10] sm:$0xff] %v1803
      %1954 = vst [vmem:[%s170 + $0x18] sm:$0xff] %v1808
      %1955 = vst [vmem:[%s170 + $0x20] sm:$0xff] %v1813
      %1956 = vst [vmem:[%s170 + $0x28] sm:$0xff] %v1818
      %1957 = vst [vmem:[%s170 + $0x30] sm:$0xff] %v1823
      %1958 = vst [vmem:[%s170 + $0x38] sm:$0xff] %v1828
      %1959 = vst [vmem:[%s170 + $0x40] sm:$0xff] %v1833
      %1960 = vst [vmem:[%s170 + $0x48] sm:$0xff] %v1838
      %1961 = vst [vmem:[%s170 + $0x50] sm:$0xff] %v1843
      %1962 = vst [vmem:[%s170 + $0x58] sm:$0xff] %v1848
      %1963 = vst [vmem:[%s170 + $0x60] sm:$0xff] %v1853
      %1964 = vst [vmem:[%s170 + $0x68] sm:$0xff] %v1858
      %1965 = vst [vmem:[%s170 + $0x70] sm:$0xff] %v1863
      %1966 = vst [vmem:[%s170 + $0x78] sm:$0xff] %v1868
      %1967 = vst [vmem:[%s170 + $0x80] sm:$0xff] %v1873
      %1968 = vst [vmem:[%s170 + $0x88] sm:$0xff] %v1878
      %1969 = vst [vmem:[%s170 + $0x90] sm:$0xff] %v1883
      %1970 = vst [vmem:[%s170 + $0x98] sm:$0xff] %v1888
      %1971 = vst [vmem:[%s170 + $0xa0] sm:$0xff] %v1893
      %1972 = vst [vmem:[%s170 + $0xa8] sm:$0xff] %v1898
      %1973 = vst [vmem:[%s170 + $0xb0] sm:$0xff] %v1903
      %1974 = vst [vmem:[%s170 + $0xb8] sm:$0xff] %v1908
      %1975 = vst [vmem:[%s170 + $0xc0] sm:$0xff] %v1913
      %1976 = vst [vmem:[%s170 + $0xc8] sm:$0xff] %v1918
      %1977 = vst [vmem:[%s170 + $0xd0] sm:$0xff] %v1923
      %1978 = vst [vmem:[%s170 + $0xd8] sm:$0xff] %v1928
      %1979 = vst [vmem:[%s170 + $0xe0] sm:$0xff] %v1933
      %1980 = vst [vmem:[%s170 + $0xe8] sm:$0xff] %v1938
      %1981 = vst [vmem:[%s170 + $0xf0] sm:$0xff] %v1943
      %1982 = vst [vmem:[%s170 + $0xf8] sm:$0xff] %v1948
      %p1983 = scmp.lt.s32.totalorder %s14, 1
      %s1984 = scalar_select %p1983, %s14, 1
      %s1985 = smul.addr %s1984, 32
      %s1986 = smul.addr %s1985, 8
      %s1987 = scalar_lea.vmem %s3, %s1986
      // Predicated region
      $region33: #{zero_conv2d.1} parent=31 // pred_check
        %p1988 = pneg %p100
      $region34: #{zero_conv2d.1} parent=31 // pred_check_branch
        %1990 = sbr.rel (%p1988) target = $region36
      $region35: #{zero_conv2d.1} parent=31 // pred_region
        _
      $region36: #{zero_conv2d.1} parent=31 // pred_fallthru
        _
    $region32: #{zero_conv2d.1} parent=5 // pred_fallthru
      _
    %p1991 = scmp.le.s32.totalorder 2, %s9
    // Predicated region
    $region37: #{zero_conv2d.1} parent=5 // pred_check
      %p1992 = pneg %p1991
    $region38: #{zero_conv2d.1} parent=5 // pred_check_branch
      %1994 = sbr.rel (%p1992) target = $region40
    $region39: #{zero_conv2d.1} parent=5 // pred_region
      %s1995 = ssub.s32 %s9, 2
      // Predicated region
      $region41: #{zero_conv2d.1} parent=39 // pred_check
        %p1996 = pneg %p106
      $region42: #{zero_conv2d.1} parent=39 // pred_check_branch
        %1998 = sbr.rel (%p1996) target = $region44
      $region43: #{zero_conv2d.1} parent=39 // pred_region
        %p1999 = scmp.lt.s32.totalorder %s15, 1
        %s2000 = scalar_select %p1999, %s15, 1
        %s2001 = smul.addr %s2000, 32
        %s2002 = smul.addr %s2001, 8
        %s2003 = scalar_lea.vmem %s3, %s2002
      $region44: #{zero_conv2d.1} parent=39 // pred_fallthru
        _
    $region40: #{zero_conv2d.1} parent=5 // pred_fallthru
      _
  $region6: #{zero_conv2d.1} parent=0 // loop_footer
    %s13 = sadd.s32 1, %s9
  $region7: #{zero_conv2d.1} parent=0 // loop_footer_branch
    %8 = sbr.rel target = $region3
  $region8: #{zero_conv2d.1} parent=0 // loop_exit
    _

</llo_original>
